<compile_context>
chip_gen: v7x
topology: tpu7x:2x2x1
jax: 0.10.0
libtpu: 0.0.40
codegen_flags: <defaults>
</compile_context>

<pallas_src>
import functools
import math

import jax
import jax.numpy as jnp
from jax.experimental import pallas as pl
from jax.experimental.pallas import tpu as pltpu


# ----------------------------- config -------------------------------------- #
class Config:
    n_enc_vocab = 32
    n_dec_seq = 8
    d_hidn = 32
    n_head = 4
    d_head = 8
    d_ff = 64
    i_pad = 0
    dropout = 0.0            # identity at inference
    layer_norm_epsilon = 1e-12


# ----------------------------- fused kernel -------------------------------- #
def _ln(h, g, b, eps):
    """LayerNorm over the last dim (biased variance), matching nn.LayerNorm."""
    mean = jnp.mean(h, axis=-1, keepdims=True)
    c = h - mean
    var = jnp.mean(c * c, axis=-1, keepdims=True)
    return c * jax.lax.rsqrt(var + eps) * g + b


def _encoder_layer_kernel(
    x_ref, mask_ref,
    wqkv_ref, wo_ref, wff1_ref, wff2_ref, vec_ref,
    out_ref, prob_ref,
    *, n_head, d_head, d_ff, eps,
):
    B, S, D = x_ref.shape
    HD = n_head * d_head
    bf16 = jnp.bfloat16

    x = x_ref[...]                       # (B, S, D) f32
    xf = x.reshape(B * S, D)             # merge leading dims (lane dim untouched)
    mask = mask_ref[...]                 # (B, S, S) additive f32: 0 / -1e9

    # Small bias / LayerNorm vectors, packed into one slab (single DMA).
    b_qkv = vec_ref[0:1, :3 * HD]        # (1, 3HD)  (already 1/sqrt(dh)-scaled Q part)
    b_o   = vec_ref[1:2, :D]
    g1    = vec_ref[2:3, :D]
    b1    = vec_ref[3:4, :D]
    b_ff1 = vec_ref[4:5, :d_ff]
    b_ff2 = vec_ref[5:6, :D]
    g2    = vec_ref[6:7, :D]
    b2    = vec_ref[7:8, :D]

    # ---- fused Q|K|V projection: one (B*S, D) @ (D, 3HD) bf16 MXU pass ------
    qkv = jnp.dot(xf.astype(bf16), wqkv_ref[...],
                  preferred_element_type=jnp.float32) + b_qkv          # (B*S, 3HD) f32

    # ---- multi-head scaled-dot-product attention (all batches per head) -----
    # TODO(synk): at production head counts move heads onto a grid axis or a
    # lax.fori_loop so vreg live ranges stay bounded (harmless at H=4, S=8).
    ctx_parts = []
    prob_parts = []
    for h in range(n_head):
        lo = h * d_head
        q_h = qkv[:, lo:lo + d_head].reshape(B, S, d_head)
        k_h = qkv[:, HD + lo:HD + lo + d_head].reshape(B, S, d_head)
        v_h = qkv[:, 2 * HD + lo:2 * HD + lo + d_head].reshape(B, S, d_head)

        # scale already folded into Q weights/bias.
        s_h = jnp.einsum('bqd,bkd->bqk', q_h.astype(bf16), k_h.astype(bf16),
                         preferred_element_type=jnp.float32) + mask    # (B, S, S)
        m_h = jnp.max(s_h, axis=-1, keepdims=True)
        e_h = jnp.exp(s_h - m_h)
        p_h = e_h / jnp.sum(e_h, axis=-1, keepdims=True)   # exact: stored probs sum to 1
        prob_parts.append(p_h)

        ctx_h = jnp.einsum('bqk,bkd->bqd', p_h.astype(bf16), v_h.astype(bf16),
                           preferred_element_type=jnp.float32)         # (B, S, dh)
        ctx_parts.append(ctx_h.reshape(B * S, d_head))

    # Single lane-packed store of all heads' probabilities (wrapper untangles).
    prob_ref[...] = jnp.concatenate(prob_parts, axis=-1)               # (B, S, H*S)

    # ---- head concat (lane placement) + ONE output projection ---------------
    ctx = jnp.concatenate(ctx_parts, axis=-1)                          # (B*S, HD)
    att = jnp.dot(ctx.astype(bf16), wo_ref[...],
                  preferred_element_type=jnp.float32) + b_o            # (B*S, D)

    # ---- residual + LayerNorm1 (fused) --------------------------------------
    x1 = _ln(xf + att, g1, b1, eps)                                    # (B*S, D)

    # ---- position-wise FFN: Conv1d(k=1) == Linear, exact erf-GELU -----------
    hdd = jnp.dot(x1.astype(bf16), wff1_ref[...],
                  preferred_element_type=jnp.float32) + b_ff1          # (B*S, Dff)
    hdd = 0.5 * hdd * (1.0 + jax.lax.erf(hdd * (1.0 / math.sqrt(2.0))))
    ff = jnp.dot(hdd.astype(bf16), wff2_ref[...],
                 preferred_element_type=jnp.float32) + b_ff2           # (B*S, D)

    # ---- residual + LayerNorm2 (fused) --------------------------------------
    out_ref[...] = _ln(ff + x1, g2, b2, eps).reshape(B, S, D)


def encoder_layer_forward(cfg, lp, inputs, attn_mask):
    """One fused EncoderLayer forward.

    inputs:    (B, S, d_hidn) float32
    attn_mask: (B, S, S) bool  (True = masked key position)
    returns (outputs (B,S,D), attn_prob (B,H,S,S))
    """
    B, S, D = inputs.shape
    H, dh, Dff = cfg.n_head, cfg.d_head, cfg.d_ff
    HD = H * dh
    scale = 1.0 / math.sqrt(dh)

    # Additive float mask (0 / -1e9), DMA'd once for the whole kernel.
    add_mask = jnp.where(attn_mask, jnp.float32(-1e9), jnp.float32(0.0))

    # Fold 1/sqrt(d_head) into the Q columns of the fused QKV weight and the Q
    # segment of its bias (constant fold on weights, not input pre-scaling).
    col_scale = jnp.concatenate([jnp.full((HD,), scale, jnp.float32),
                                 jnp.ones((2 * HD,), jnp.float32)])
    w_qkv = (lp["W_qkv"] * col_scale[None, :]).astype(jnp.bfloat16)
    b_qkv = lp["b_qkv"] * col_scale

    # Big weight matrices go to the MXU as bf16 (halves their DMA bytes too).
    w_o = lp["W_O"].astype(jnp.bfloat16)
    w_ff1 = lp["W_ff1"].astype(jnp.bfloat16)
    w_ff2 = lp["W_ff2"].astype(jnp.bfloat16)

    # Pack the eight small bias / LN vectors into one (8, Wmax) f32 slab.
    Wmax = max(3 * HD, Dff, D)

    def row(v):
        return jnp.pad(v.astype(jnp.float32), (0, Wmax - v.shape[0]))[None, :]

    vec_slab = jnp.concatenate([
        row(b_qkv), row(lp["b_O"]), row(lp["ln1_g"]), row(lp["ln1_b"]),
        row(lp["b_ff1"]), row(lp["b_ff2"]), row(lp["ln2_g"]), row(lp["ln2_b"]),
    ], axis=0)

    kernel = functools.partial(
        _encoder_layer_kernel,
        n_head=H, d_head=dh, d_ff=Dff, eps=cfg.layer_norm_epsilon,
    )

    def whole(shape):
        # Full-array block, single grid step -> every operand DMA'd exactly once.
        return pl.BlockSpec(shape, lambda i: (0,) * len(shape))

    out, prob_flat = pl.pallas_call(
        kernel,
        out_shape=(
            jax.ShapeDtypeStruct((B, S, D), jnp.float32),
            jax.ShapeDtypeStruct((B, S, H * S), jnp.float32),
        ),
        # Batch collapsed into the block: one step total (single-TC chips pay
        # the fixed per-step cost once). On v7x with larger B, switch to
        # grid=(B_tiles,) + dimension_semantics=("parallel",) to feed both TCs.
        grid=(1,),
        in_specs=[
            whole((B, S, D)),          # activations
            whole((B, S, S)),          # additive mask
            whole((D, 3 * HD)),        # fused W_QKV (bf16, Q-cols pre-scaled)
            whole((HD, D)),            # W_O (bf16)
            whole((D, Dff)),           # FFN conv1 (k=1) W (bf16)
            whole((Dff, D)),           # FFN conv2 (k=1) W (bf16)
            whole((8, Wmax)),          # packed bias / LN vector slab (f32)
        ],
        out_specs=(
            whole((B, S, D)),
            whole((B, S, H * S)),
        ),
        compiler_params=pltpu.CompilerParams(
            dimension_semantics=("arbitrary",),
        ),
    )(inputs, add_mask, w_qkv, w_o, w_ff1, w_ff2, vec_slab)

    # Lane-packed (B, S, H*S) -> module layout (B, H, S, S): layout plumbing only.
    prob = prob_flat.reshape(B, S, H, S).transpose(0, 2, 1, 3)
    return out, prob


# ----------------------------- parameters ---------------------------------- #
def init_layer_params(cfg, key):
    keys = jax.random.split(key, 16)
    ki = iter(keys)

    def nrm(shape, scale=0.02):
        return scale * jax.random.normal(next(ki), shape, dtype=jnp.float32)

    D, HD, Dff = cfg.d_hidn, cfg.n_head * cfg.d_head, cfg.d_ff
    return {
        # W_Q | W_K | W_V pre-fused into a single (D, 3*H*dh) matrix.
        "W_qkv": nrm((D, 3 * HD)),
        "b_qkv": nrm((3 * HD,)),
        "W_O": nrm((HD, D)),
        "b_O": nrm((D,)),
        "ln1_g": jnp.ones((D,), jnp.float32),
        "ln1_b": jnp.zeros((D,), jnp.float32),
        # Conv1d(k=1) weights stored as (in, out) matrices.
        "W_ff1": nrm((D, Dff)),
        "b_ff1": nrm((Dff,)),
        "W_ff2": nrm((Dff, D)),
        "b_ff2": nrm((D,)),
        "ln2_g": jnp.ones((D,), jnp.float32),
        "ln2_b": jnp.zeros((D,), jnp.float32),
    }


# ----------------------------- pure-JAX reference --------------------------- #
def encoder_layer_reference(cfg, lp, inputs, attn_mask):
    B, S, D = inputs.shape
    H, dh = cfg.n_head, cfg.d_head
    HD = H * dh
    eps = cfg.layer_norm_epsilon

    def ln(h, g, b):
        mu = jnp.mean(h, axis=-1, keepdims=True)
        var = jnp.mean((h - mu) ** 2, axis=-1, keepdims=True)
        return (h - mu) / jnp.sqrt(var + eps) * g + b

    qkv = inputs @ lp["W_qkv"] + lp["b_qkv"]
    q, k, v = jnp.split(qkv, 3, axis=-1)

    def heads(t):
        return t.reshape(B, S, H, dh).transpose(0, 2, 1, 3)

    q, k, v = heads(q), heads(k), heads(v)
    scores = jnp.einsum("bhqd,bhkd->bhqk", q, k) / math.sqrt(dh)
    scores = jnp.where(attn_mask[:, None, :, :], jnp.float32(-1e9), scores)
    prob = jax.nn.softmax(scores, axis=-1)
    ctx = jnp.einsum("bhqk,bhkd->bhqd", prob, v)
    ctx = ctx.transpose(0, 2, 1, 3).reshape(B, S, HD)
    att = ctx @ lp["W_O"] + lp["b_O"]
    x1 = ln(inputs + att, lp["ln1_g"], lp["ln1_b"])
    h = x1 @ lp["W_ff1"] + lp["b_ff1"]
    h = 0.5 * h * (1.0 + jax.lax.erf(h / math.sqrt(2.0)))
    ff = h @ lp["W_ff2"] + lp["b_ff2"]
    out = ln(ff + x1, lp["ln2_g"], lp["ln2_b"])
    return out, prob


# ----------------------------- main ----------------------------------------- #
if __name__ == "__main__":
    cfg = Config()
    key = jax.random.PRNGKey(0)
    kp, kx, kt = jax.random.split(key, 3)

    params = init_layer_params(cfg, kp)

    B, S = 2, cfg.n_dec_seq
    # Hidden-state inputs to the encoder layer.
    x = 0.1 * jax.random.normal(kx, (B, S, cfg.d_hidn), dtype=jnp.float32)
    # Token ids only to derive a realistic key-pad mask (last two of batch 1 padded).
    tokens = jax.random.randint(kt, (B, S), 1, cfg.n_enc_vocab, dtype=jnp.int32)
    tokens = tokens.at[1, -2:].set(cfg.i_pad)
    attn_mask = jnp.broadcast_to((tokens == cfg.i_pad)[:, None, :], (B, S, S))  # bool

    fwd = jax.jit(lambda p, xi, m: encoder_layer_forward(cfg, p, xi, m))
    outputs, attn_prob = fwd(params, x, attn_mask)
    jax.block_until_ready(outputs)
    jax.block_until_ready(attn_prob)

    # Correctness check against the pure-JAX f32 reference (tolerance covers the
    # bf16 MXU-operand casts; softmax / LayerNorm stats stay f32 in the kernel).
    ref_out, ref_prob = encoder_layer_reference(cfg, params, x, attn_mask)
    assert outputs.shape == (B, S, cfg.d_hidn)
    assert attn_prob.shape == (B, cfg.n_head, S, S)
    assert bool(jnp.all(jnp.isfinite(outputs)))
    assert float(jnp.max(jnp.abs(outputs - ref_out))) < 2e-2
    assert float(jnp.max(jnp.abs(attn_prob - ref_prob))) < 2e-2
    # Stored attention probabilities use an exact softmax division -> rows sum to 1.
    assert float(jnp.max(jnp.abs(jnp.sum(attn_prob, axis=-1) - 1.0))) < 1e-5

    print("KERNEL_OK")
</pallas_src>

<mosaic_0001>
module attributes {stable_mosaic.version = 11 : i64} {
  func.func @_encoder_layer_kernel(%arg0: i32, %arg1: memref<2x8x32xf32, #tpu.memory_space<vmem>>, %arg2: memref<2x8x8xf32, #tpu.memory_space<vmem>>, %arg3: memref<32x96xbf16, #tpu.memory_space<vmem>>, %arg4: memref<32x32xbf16, #tpu.memory_space<vmem>>, %arg5: memref<32x64xbf16, #tpu.memory_space<vmem>>, %arg6: memref<64x32xbf16, #tpu.memory_space<vmem>>, %arg7: memref<8x96xf32, #tpu.memory_space<vmem>>, %arg8: memref<2x8x32xf32, #tpu.memory_space<vmem>>, %arg9: memref<2x8x32xf32, #tpu.memory_space<vmem>>) attributes {dimension_semantics = [#tpu.dimension_semantics<arbitrary>], iteration_bounds = array<i64: 1>, scalar_prefetch = 0 : i64, scratch_operands = 0 : i64, tpu.core_type = #tpu.core_type<tc>, window_params = [{pipeline_mode = #tpu.pipeline_mode<synchronous>, transform_indices = @transform_0, window_bounds = array<i64: 2, 8, 32>}, {pipeline_mode = #tpu.pipeline_mode<synchronous>, transform_indices = @transform_1, window_bounds = array<i64: 2, 8, 8>}, {pipeline_mode = #tpu.pipeline_mode<synchronous>, transform_indices = @transform_2, window_bounds = array<i64: 32, 96>}, {pipeline_mode = #tpu.pipeline_mode<synchronous>, transform_indices = @transform_3, window_bounds = array<i64: 32, 32>}, {pipeline_mode = #tpu.pipeline_mode<synchronous>, transform_indices = @transform_4, window_bounds = array<i64: 32, 64>}, {pipeline_mode = #tpu.pipeline_mode<synchronous>, transform_indices = @transform_5, window_bounds = array<i64: 64, 32>}, {pipeline_mode = #tpu.pipeline_mode<synchronous>, transform_indices = @transform_6, window_bounds = array<i64: 8, 96>}, {pipeline_mode = #tpu.pipeline_mode<synchronous>, transform_indices = @transform_7, window_bounds = array<i64: 2, 8, 32>}, {pipeline_mode = #tpu.pipeline_mode<synchronous>, transform_indices = @transform_8, window_bounds = array<i64: 2, 8, 32>}]} {
    %c0 = arith.constant 0 : index
    %c0_0 = arith.constant 0 : index
    %c0_1 = arith.constant 0 : index
    %0 = vector.load %arg1[%c0, %c0_0, %c0_1] : memref<2x8x32xf32, #tpu.memory_space<vmem>>, vector<2x8x32xf32>
    %1 = vector.shape_cast %0 : vector<2x8x32xf32> to vector<16x32xf32>
    %c0_2 = arith.constant 0 : index
    %c0_3 = arith.constant 0 : index
    %c0_4 = arith.constant 0 : index
    %2 = vector.load %arg2[%c0_2, %c0_3, %c0_4] : memref<2x8x8xf32, #tpu.memory_space<vmem>>, vector<2x8x8xf32>
    %c0_5 = arith.constant 0 : index
    %c0_6 = arith.constant 0 : index
    %3 = vector.load %arg7[%c0_5, %c0_6] : memref<8x96xf32, #tpu.memory_space<vmem>>, vector<1x96xf32>
    %c1 = arith.constant 1 : index
    %c0_7 = arith.constant 0 : index
    %4 = vector.load %arg7[%c1, %c0_7] : memref<8x96xf32, #tpu.memory_space<vmem>>, vector<1x32xf32>
    %c2 = arith.constant 2 : index
    %c0_8 = arith.constant 0 : index
    %5 = vector.load %arg7[%c2, %c0_8] : memref<8x96xf32, #tpu.memory_space<vmem>>, vector<1x32xf32>
    %c3 = arith.constant 3 : index
    %c0_9 = arith.constant 0 : index
    %6 = vector.load %arg7[%c3, %c0_9] : memref<8x96xf32, #tpu.memory_space<vmem>>, vector<1x32xf32>
    %c4 = arith.constant 4 : index
    %c0_10 = arith.constant 0 : index
    %7 = vector.load %arg7[%c4, %c0_10] : memref<8x96xf32, #tpu.memory_space<vmem>>, vector<1x64xf32>
    %c5 = arith.constant 5 : index
    %c0_11 = arith.constant 0 : index
    %8 = vector.load %arg7[%c5, %c0_11] : memref<8x96xf32, #tpu.memory_space<vmem>>, vector<1x32xf32>
    %c6 = arith.constant 6 : index
    %c0_12 = arith.constant 0 : index
    %9 = vector.load %arg7[%c6, %c0_12] : memref<8x96xf32, #tpu.memory_space<vmem>>, vector<1x32xf32>
    %c7 = arith.constant 7 : index
    %c0_13 = arith.constant 0 : index
    %10 = vector.load %arg7[%c7, %c0_13] : memref<8x96xf32, #tpu.memory_space<vmem>>, vector<1x32xf32>
    %11 = arith.truncf %1 : vector<16x32xf32> to vector<16x32xbf16>
    %c0_14 = arith.constant 0 : index
    %c0_15 = arith.constant 0 : index
    %12 = vector.load %arg3[%c0_14, %c0_15] : memref<32x96xbf16, #tpu.memory_space<vmem>>, vector<32x96xbf16>
    %cst = arith.constant dense<0.000000e+00> : vector<16x96xf32>
    %13 = tpu.matmul %11, %12, %cst {dimension_numbers = #tpu.dot_dimension_numbers<[1], [0], [0], [1], [0, 0, 1, 1], [], []>} : vector<16x32xbf16>, vector<32x96xbf16>, vector<16x96xf32> -> vector<16x96xf32>
    %14 = vector.broadcast %3 : vector<1x96xf32> to vector<16x96xf32>
    %15 = arith.addf %13, %14 : vector<16x96xf32>
    %16 = vector.extract_strided_slice %15 {offsets = [0, 0], sizes = [16, 8], strides = [1, 1]} : vector<16x96xf32> to vector<16x8xf32>
    %17 = vector.shape_cast %16 : vector<16x8xf32> to vector<2x8x8xf32>
    %18 = vector.extract_strided_slice %15 {offsets = [0, 32], sizes = [16, 8], strides = [1, 1]} : vector<16x96xf32> to vector<16x8xf32>
    %19 = vector.shape_cast %18 : vector<16x8xf32> to vector<2x8x8xf32>
    %20 = vector.extract_strided_slice %15 {offsets = [0, 64], sizes = [16, 8], strides = [1, 1]} : vector<16x96xf32> to vector<16x8xf32>
    %21 = vector.shape_cast %20 : vector<16x8xf32> to vector<2x8x8xf32>
    %22 = arith.truncf %17 : vector<2x8x8xf32> to vector<2x8x8xbf16>
    %23 = arith.truncf %19 : vector<2x8x8xf32> to vector<2x8x8xbf16>
    "tpu.trace_start"() <{level = 10 : i32, message = "bqd,bkd->bqk"}> : () -> ()
    %cst_16 = arith.constant dense<0.000000e+00> : vector<2x8x8xf32>
    %24 = tpu.matmul %22, %23, %cst_16 {dimension_numbers = #tpu.dot_dimension_numbers<[2], [2], [1], [1], [0, 0, 0, 1, 1, 1], [0], [0]>} : vector<2x8x8xbf16>, vector<2x8x8xbf16>, vector<2x8x8xf32> -> vector<2x8x8xf32>
    "tpu.trace_stop"() : () -> ()
    %25 = arith.addf %24, %2 : vector<2x8x8xf32>
    %cst_17 = arith.constant dense<0xFF800000> : vector<2x8xf32>
    %26 = vector.multi_reduction <maximumf>, %25, %cst_17 [2] : vector<2x8x8xf32> to vector<2x8xf32>
    %27 = vector.shape_cast %26 : vector<2x8xf32> to vector<2x8x1xf32>
    %28 = vector.broadcast %27 : vector<2x8x1xf32> to vector<2x8x8xf32>
    %29 = arith.subf %25, %28 : vector<2x8x8xf32>
    %30 = math.exp %29 : vector<2x8x8xf32>
    %cst_18 = arith.constant dense<0.000000e+00> : vector<2x8xf32>
    %31 = vector.multi_reduction <add>, %30, %cst_18 [2] : vector<2x8x8xf32> to vector<2x8xf32>
    %32 = vector.shape_cast %31 : vector<2x8xf32> to vector<2x8x1xf32>
    %33 = vector.broadcast %32 : vector<2x8x1xf32> to vector<2x8x8xf32>
    %34 = arith.divf %30, %33 : vector<2x8x8xf32>
    %35 = arith.truncf %34 : vector<2x8x8xf32> to vector<2x8x8xbf16>
    %36 = arith.truncf %21 : vector<2x8x8xf32> to vector<2x8x8xbf16>
    "tpu.trace_start"() <{level = 10 : i32, message = "bqk,bkd->bqd"}> : () -> ()
    %cst_19 = arith.constant dense<0.000000e+00> : vector<2x8x8xf32>
    %37 = tpu.matmul %35, %36, %cst_19 {dimension_numbers = #tpu.dot_dimension_numbers<[2], [1], [1], [2], [0, 0, 0, 1, 1, 2], [0], [0]>} : vector<2x8x8xbf16>, vector<2x8x8xbf16>, vector<2x8x8xf32> -> vector<2x8x8xf32>
    "tpu.trace_stop"() : () -> ()
    %38 = vector.shape_cast %37 : vector<2x8x8xf32> to vector<16x8xf32>
    %39 = vector.extract_strided_slice %15 {offsets = [0, 8], sizes = [16, 8], strides = [1, 1]} : vector<16x96xf32> to vector<16x8xf32>
    %40 = vector.shape_cast %39 : vector<16x8xf32> to vector<2x8x8xf32>
    %41 = vector.extract_strided_slice %15 {offsets = [0, 40], sizes = [16, 8], strides = [1, 1]} : vector<16x96xf32> to vector<16x8xf32>
    %42 = vector.shape_cast %41 : vector<16x8xf32> to vector<2x8x8xf32>
    %43 = vector.extract_strided_slice %15 {offsets = [0, 72], sizes = [16, 8], strides = [1, 1]} : vector<16x96xf32> to vector<16x8xf32>
    %44 = vector.shape_cast %43 : vector<16x8xf32> to vector<2x8x8xf32>
    %45 = arith.truncf %40 : vector<2x8x8xf32> to vector<2x8x8xbf16>
    %46 = arith.truncf %42 : vector<2x8x8xf32> to vector<2x8x8xbf16>
    "tpu.trace_start"() <{level = 10 : i32, message = "bqd,bkd->bqk"}> : () -> ()
    %cst_20 = arith.constant dense<0.000000e+00> : vector<2x8x8xf32>
    %47 = tpu.matmul %45, %46, %cst_20 {dimension_numbers = #tpu.dot_dimension_numbers<[2], [2], [1], [1], [0, 0, 0, 1, 1, 1], [0], [0]>} : vector<2x8x8xbf16>, vector<2x8x8xbf16>, vector<2x8x8xf32> -> vector<2x8x8xf32>
    "tpu.trace_stop"() : () -> ()
    %48 = arith.addf %47, %2 : vector<2x8x8xf32>
    %cst_21 = arith.constant dense<0xFF800000> : vector<2x8xf32>
    %49 = vector.multi_reduction <maximumf>, %48, %cst_21 [2] : vector<2x8x8xf32> to vector<2x8xf32>
    %50 = vector.shape_cast %49 : vector<2x8xf32> to vector<2x8x1xf32>
    %51 = vector.broadcast %50 : vector<2x8x1xf32> to vector<2x8x8xf32>
    %52 = arith.subf %48, %51 : vector<2x8x8xf32>
    %53 = math.exp %52 : vector<2x8x8xf32>
    %cst_22 = arith.constant dense<0.000000e+00> : vector<2x8xf32>
    %54 = vector.multi_reduction <add>, %53, %cst_22 [2] : vector<2x8x8xf32> to vector<2x8xf32>
    %55 = vector.shape_cast %54 : vector<2x8xf32> to vector<2x8x1xf32>
    %56 = vector.broadcast %55 : vector<2x8x1xf32> to vector<2x8x8xf32>
    %57 = arith.divf %53, %56 : vector<2x8x8xf32>
    %58 = arith.truncf %57 : vector<2x8x8xf32> to vector<2x8x8xbf16>
    %59 = arith.truncf %44 : vector<2x8x8xf32> to vector<2x8x8xbf16>
    "tpu.trace_start"() <{level = 10 : i32, message = "bqk,bkd->bqd"}> : () -> ()
    %cst_23 = arith.constant dense<0.000000e+00> : vector<2x8x8xf32>
    %60 = tpu.matmul %58, %59, %cst_23 {dimension_numbers = #tpu.dot_dimension_numbers<[2], [1], [1], [2], [0, 0, 0, 1, 1, 2], [0], [0]>} : vector<2x8x8xbf16>, vector<2x8x8xbf16>, vector<2x8x8xf32> -> vector<2x8x8xf32>
    "tpu.trace_stop"() : () -> ()
    %61 = vector.shape_cast %60 : vector<2x8x8xf32> to vector<16x8xf32>
    %62 = vector.extract_strided_slice %15 {offsets = [0, 16], sizes = [16, 8], strides = [1, 1]} : vector<16x96xf32> to vector<16x8xf32>
    %63 = vector.shape_cast %62 : vector<16x8xf32> to vector<2x8x8xf32>
    %64 = vector.extract_strided_slice %15 {offsets = [0, 48], sizes = [16, 8], strides = [1, 1]} : vector<16x96xf32> to vector<16x8xf32>
    %65 = vector.shape_cast %64 : vector<16x8xf32> to vector<2x8x8xf32>
    %66 = vector.extract_strided_slice %15 {offsets = [0, 80], sizes = [16, 8], strides = [1, 1]} : vector<16x96xf32> to vector<16x8xf32>
    %67 = vector.shape_cast %66 : vector<16x8xf32> to vector<2x8x8xf32>
    %68 = arith.truncf %63 : vector<2x8x8xf32> to vector<2x8x8xbf16>
    %69 = arith.truncf %65 : vector<2x8x8xf32> to vector<2x8x8xbf16>
    "tpu.trace_start"() <{level = 10 : i32, message = "bqd,bkd->bqk"}> : () -> ()
    %cst_24 = arith.constant dense<0.000000e+00> : vector<2x8x8xf32>
    %70 = tpu.matmul %68, %69, %cst_24 {dimension_numbers = #tpu.dot_dimension_numbers<[2], [2], [1], [1], [0, 0, 0, 1, 1, 1], [0], [0]>} : vector<2x8x8xbf16>, vector<2x8x8xbf16>, vector<2x8x8xf32> -> vector<2x8x8xf32>
    "tpu.trace_stop"() : () -> ()
    %71 = arith.addf %70, %2 : vector<2x8x8xf32>
    %cst_25 = arith.constant dense<0xFF800000> : vector<2x8xf32>
    %72 = vector.multi_reduction <maximumf>, %71, %cst_25 [2] : vector<2x8x8xf32> to vector<2x8xf32>
    %73 = vector.shape_cast %72 : vector<2x8xf32> to vector<2x8x1xf32>
    %74 = vector.broadcast %73 : vector<2x8x1xf32> to vector<2x8x8xf32>
    %75 = arith.subf %71, %74 : vector<2x8x8xf32>
    %76 = math.exp %75 : vector<2x8x8xf32>
    %cst_26 = arith.constant dense<0.000000e+00> : vector<2x8xf32>
    %77 = vector.multi_reduction <add>, %76, %cst_26 [2] : vector<2x8x8xf32> to vector<2x8xf32>
    %78 = vector.shape_cast %77 : vector<2x8xf32> to vector<2x8x1xf32>
    %79 = vector.broadcast %78 : vector<2x8x1xf32> to vector<2x8x8xf32>
    %80 = arith.divf %76, %79 : vector<2x8x8xf32>
    %81 = arith.truncf %80 : vector<2x8x8xf32> to vector<2x8x8xbf16>
    %82 = arith.truncf %67 : vector<2x8x8xf32> to vector<2x8x8xbf16>
    "tpu.trace_start"() <{level = 10 : i32, message = "bqk,bkd->bqd"}> : () -> ()
    %cst_27 = arith.constant dense<0.000000e+00> : vector<2x8x8xf32>
    %83 = tpu.matmul %81, %82, %cst_27 {dimension_numbers = #tpu.dot_dimension_numbers<[2], [1], [1], [2], [0, 0, 0, 1, 1, 2], [0], [0]>} : vector<2x8x8xbf16>, vector<2x8x8xbf16>, vector<2x8x8xf32> -> vector<2x8x8xf32>
    "tpu.trace_stop"() : () -> ()
    %84 = vector.shape_cast %83 : vector<2x8x8xf32> to vector<16x8xf32>
    %85 = vector.extract_strided_slice %15 {offsets = [0, 24], sizes = [16, 8], strides = [1, 1]} : vector<16x96xf32> to vector<16x8xf32>
    %86 = vector.shape_cast %85 : vector<16x8xf32> to vector<2x8x8xf32>
    %87 = vector.extract_strided_slice %15 {offsets = [0, 56], sizes = [16, 8], strides = [1, 1]} : vector<16x96xf32> to vector<16x8xf32>
    %88 = vector.shape_cast %87 : vector<16x8xf32> to vector<2x8x8xf32>
    %89 = vector.extract_strided_slice %15 {offsets = [0, 88], sizes = [16, 8], strides = [1, 1]} : vector<16x96xf32> to vector<16x8xf32>
    %90 = vector.shape_cast %89 : vector<16x8xf32> to vector<2x8x8xf32>
    %91 = arith.truncf %86 : vector<2x8x8xf32> to vector<2x8x8xbf16>
    %92 = arith.truncf %88 : vector<2x8x8xf32> to vector<2x8x8xbf16>
    "tpu.trace_start"() <{level = 10 : i32, message = "bqd,bkd->bqk"}> : () -> ()
    %cst_28 = arith.constant dense<0.000000e+00> : vector<2x8x8xf32>
    %93 = tpu.matmul %91, %92, %cst_28 {dimension_numbers = #tpu.dot_dimension_numbers<[2], [2], [1], [1], [0, 0, 0, 1, 1, 1], [0], [0]>} : vector<2x8x8xbf16>, vector<2x8x8xbf16>, vector<2x8x8xf32> -> vector<2x8x8xf32>
    "tpu.trace_stop"() : () -> ()
    %94 = arith.addf %93, %2 : vector<2x8x8xf32>
    %cst_29 = arith.constant dense<0xFF800000> : vector<2x8xf32>
    %95 = vector.multi_reduction <maximumf>, %94, %cst_29 [2] : vector<2x8x8xf32> to vector<2x8xf32>
    %96 = vector.shape_cast %95 : vector<2x8xf32> to vector<2x8x1xf32>
    %97 = vector.broadcast %96 : vector<2x8x1xf32> to vector<2x8x8xf32>
    %98 = arith.subf %94, %97 : vector<2x8x8xf32>
    %99 = math.exp %98 : vector<2x8x8xf32>
    %cst_30 = arith.constant dense<0.000000e+00> : vector<2x8xf32>
    %100 = vector.multi_reduction <add>, %99, %cst_30 [2] : vector<2x8x8xf32> to vector<2x8xf32>
    %101 = vector.shape_cast %100 : vector<2x8xf32> to vector<2x8x1xf32>
    %102 = vector.broadcast %101 : vector<2x8x1xf32> to vector<2x8x8xf32>
    %103 = arith.divf %99, %102 : vector<2x8x8xf32>
    %104 = arith.truncf %103 : vector<2x8x8xf32> to vector<2x8x8xbf16>
    %105 = arith.truncf %90 : vector<2x8x8xf32> to vector<2x8x8xbf16>
    "tpu.trace_start"() <{level = 10 : i32, message = "bqk,bkd->bqd"}> : () -> ()
    %cst_31 = arith.constant dense<0.000000e+00> : vector<2x8x8xf32>
    %106 = tpu.matmul %104, %105, %cst_31 {dimension_numbers = #tpu.dot_dimension_numbers<[2], [1], [1], [2], [0, 0, 0, 1, 1, 2], [0], [0]>} : vector<2x8x8xbf16>, vector<2x8x8xbf16>, vector<2x8x8xf32> -> vector<2x8x8xf32>
    "tpu.trace_stop"() : () -> ()
    %107 = vector.shape_cast %106 : vector<2x8x8xf32> to vector<16x8xf32>
    %108 = tpu.concatenate %34, %57, %80, %103 in 2 : vector<2x8x8xf32>, vector<2x8x8xf32>, vector<2x8x8xf32>, vector<2x8x8xf32> -> vector<2x8x32xf32>
    %c0_32 = arith.constant 0 : index
    %c0_33 = arith.constant 0 : index
    %c0_34 = arith.constant 0 : index
    %109 = vector.load %arg9[%c0_32, %c0_33, %c0_34] : memref<2x8x32xf32, #tpu.memory_space<vmem>>, vector<2x8x32xf32>
    tpu.vector_store %arg9[%c0_32, %c0_33, %c0_34], %108 {strides = array<i32>} : memref<2x8x32xf32, #tpu.memory_space<vmem>>, vector<2x8x32xf32>,
    %110 = tpu.concatenate %38, %61, %84, %107 in 1 : vector<16x8xf32>, vector<16x8xf32>, vector<16x8xf32>, vector<16x8xf32> -> vector<16x32xf32>
    %111 = arith.truncf %110 : vector<16x32xf32> to vector<16x32xbf16>
    %c0_35 = arith.constant 0 : index
    %c0_36 = arith.constant 0 : index
    %112 = vector.load %arg4[%c0_35, %c0_36] : memref<32x32xbf16, #tpu.memory_space<vmem>>, vector<32x32xbf16>
    %cst_37 = arith.constant dense<0.000000e+00> : vector<16x32xf32>
    %113 = tpu.matmul %111, %112, %cst_37 {dimension_numbers = #tpu.dot_dimension_numbers<[1], [0], [0], [1], [0, 0, 1, 1], [], []>} : vector<16x32xbf16>, vector<32x32xbf16>, vector<16x32xf32> -> vector<16x32xf32>
    %114 = vector.broadcast %4 : vector<1x32xf32> to vector<16x32xf32>
    %115 = arith.addf %113, %114 : vector<16x32xf32>
    %116 = arith.addf %1, %115 : vector<16x32xf32>
    %cst_38 = arith.constant dense<0.000000e+00> : vector<16xf32>
    %117 = vector.multi_reduction <add>, %116, %cst_38 [1] : vector<16x32xf32> to vector<16xf32>
    %118 = vector.shape_cast %117 : vector<16xf32> to vector<16x1xf32>
    %cst_39 = arith.constant 3.200000e+01 : f32
    %119 = vector.broadcast %cst_39 : f32 to vector<16x1xf32>
    %120 = arith.divf %118, %119 : vector<16x1xf32>
    %121 = vector.broadcast %120 : vector<16x1xf32> to vector<16x32xf32>
    %122 = arith.subf %116, %121 : vector<16x32xf32>
    %123 = arith.mulf %122, %122 : vector<16x32xf32>
    %cst_40 = arith.constant dense<0.000000e+00> : vector<16xf32>
    %124 = vector.multi_reduction <add>, %123, %cst_40 [1] : vector<16x32xf32> to vector<16xf32>
    %125 = vector.shape_cast %124 : vector<16xf32> to vector<16x1xf32>
    %cst_41 = arith.constant 3.200000e+01 : f32
    %126 = vector.broadcast %cst_41 : f32 to vector<16x1xf32>
    %127 = arith.divf %125, %126 : vector<16x1xf32>
    %cst_42 = arith.constant 9.99999996E-13 : f32
    %128 = vector.broadcast %cst_42 : f32 to vector<16x1xf32>
    %129 = arith.addf %127, %128 : vector<16x1xf32>
    %130 = math.rsqrt %129 : vector<16x1xf32>
    %131 = vector.broadcast %130 : vector<16x1xf32> to vector<16x32xf32>
    %132 = arith.mulf %122, %131 : vector<16x32xf32>
    %133 = vector.broadcast %5 : vector<1x32xf32> to vector<16x32xf32>
    %134 = arith.mulf %132, %133 : vector<16x32xf32>
    %135 = vector.broadcast %6 : vector<1x32xf32> to vector<16x32xf32>
    %136 = arith.addf %134, %135 : vector<16x32xf32>
    %137 = arith.truncf %136 : vector<16x32xf32> to vector<16x32xbf16>
    %c0_43 = arith.constant 0 : index
    %c0_44 = arith.constant 0 : index
    %138 = vector.load %arg5[%c0_43, %c0_44] : memref<32x64xbf16, #tpu.memory_space<vmem>>, vector<32x64xbf16>
    %cst_45 = arith.constant dense<0.000000e+00> : vector<16x64xf32>
    %139 = tpu.matmul %137, %138, %cst_45 {dimension_numbers = #tpu.dot_dimension_numbers<[1], [0], [0], [1], [0, 0, 1, 1], [], []>} : vector<16x32xbf16>, vector<32x64xbf16>, vector<16x64xf32> -> vector<16x64xf32>
    %140 = vector.broadcast %7 : vector<1x64xf32> to vector<16x64xf32>
    %141 = arith.addf %139, %140 : vector<16x64xf32>
    %cst_46 = arith.constant 5.000000e-01 : f32
    %142 = vector.broadcast %cst_46 : f32 to vector<16x64xf32>
    %143 = arith.mulf %142, %141 : vector<16x64xf32>
    %cst_47 = arith.constant 0.707106769 : f32
    %144 = vector.broadcast %cst_47 : f32 to vector<16x64xf32>
    %145 = arith.mulf %141, %144 : vector<16x64xf32>
    %146 = math.erf %145 : vector<16x64xf32>
    %cst_48 = arith.constant 1.000000e+00 : f32
    %147 = vector.broadcast %cst_48 : f32 to vector<16x64xf32>
    %148 = arith.addf %147, %146 : vector<16x64xf32>
    %149 = arith.mulf %143, %148 : vector<16x64xf32>
    %150 = arith.truncf %149 : vector<16x64xf32> to vector<16x64xbf16>
    %c0_49 = arith.constant 0 : index
    %c0_50 = arith.constant 0 : index
    %151 = vector.load %arg6[%c0_49, %c0_50] : memref<64x32xbf16, #tpu.memory_space<vmem>>, vector<64x32xbf16>
    %cst_51 = arith.constant dense<0.000000e+00> : vector<16x32xf32>
    %152 = tpu.matmul %150, %151, %cst_51 {dimension_numbers = #tpu.dot_dimension_numbers<[1], [0], [0], [1], [0, 0, 1, 1], [], []>} : vector<16x64xbf16>, vector<64x32xbf16>, vector<16x32xf32> -> vector<16x32xf32>
    %153 = vector.broadcast %8 : vector<1x32xf32> to vector<16x32xf32>
    %154 = arith.addf %152, %153 : vector<16x32xf32>
    %155 = arith.addf %154, %136 : vector<16x32xf32>
    %cst_52 = arith.constant dense<0.000000e+00> : vector<16xf32>
    %156 = vector.multi_reduction <add>, %155, %cst_52 [1] : vector<16x32xf32> to vector<16xf32>
    %157 = vector.shape_cast %156 : vector<16xf32> to vector<16x1xf32>
    %cst_53 = arith.constant 3.200000e+01 : f32
    %158 = vector.broadcast %cst_53 : f32 to vector<16x1xf32>
    %159 = arith.divf %157, %158 : vector<16x1xf32>
    %160 = vector.broadcast %159 : vector<16x1xf32> to vector<16x32xf32>
    %161 = arith.subf %155, %160 : vector<16x32xf32>
    %162 = arith.mulf %161, %161 : vector<16x32xf32>
    %cst_54 = arith.constant dense<0.000000e+00> : vector<16xf32>
    %163 = vector.multi_reduction <add>, %162, %cst_54 [1] : vector<16x32xf32> to vector<16xf32>
    %164 = vector.shape_cast %163 : vector<16xf32> to vector<16x1xf32>
    %cst_55 = arith.constant 3.200000e+01 : f32
    %165 = vector.broadcast %cst_55 : f32 to vector<16x1xf32>
    %166 = arith.divf %164, %165 : vector<16x1xf32>
    %cst_56 = arith.constant 9.99999996E-13 : f32
    %167 = vector.broadcast %cst_56 : f32 to vector<16x1xf32>
    %168 = arith.addf %166, %167 : vector<16x1xf32>
    %169 = math.rsqrt %168 : vector<16x1xf32>
    %170 = vector.broadcast %169 : vector<16x1xf32> to vector<16x32xf32>
    %171 = arith.mulf %161, %170 : vector<16x32xf32>
    %172 = vector.broadcast %9 : vector<1x32xf32> to vector<16x32xf32>
    %173 = arith.mulf %171, %172 : vector<16x32xf32>
    %174 = vector.broadcast %10 : vector<1x32xf32> to vector<16x32xf32>
    %175 = arith.addf %173, %174 : vector<16x32xf32>
    %176 = vector.shape_cast %175 : vector<16x32xf32> to vector<2x8x32xf32>
    %c0_57 = arith.constant 0 : index
    %c0_58 = arith.constant 0 : index
    %c0_59 = arith.constant 0 : index
    %177 = vector.load %arg8[%c0_57, %c0_58, %c0_59] : memref<2x8x32xf32, #tpu.memory_space<vmem>>, vector<2x8x32xf32>
    tpu.vector_store %arg8[%c0_57, %c0_58, %c0_59], %176 {strides = array<i32>} : memref<2x8x32xf32, #tpu.memory_space<vmem>>, vector<2x8x32xf32>,
    return
  }
  func.func @transform_0(%arg0: i32) -> (i32, i32, i32) {
    %c0_i32 = arith.constant 0 : i32
    %c0_i32_0 = arith.constant 0 : i32
    %c0_i32_1 = arith.constant 0 : i32
    %c0_i32_2 = arith.constant 0 : i32
    return %c0_i32, %c0_i32_0, %c0_i32_1 : i32, i32, i32
  }
  func.func @transform_1(%arg0: i32) -> (i32, i32, i32) {
    %c0_i32 = arith.constant 0 : i32
    %c0_i32_0 = arith.constant 0 : i32
    %c0_i32_1 = arith.constant 0 : i32
    %c0_i32_2 = arith.constant 0 : i32
    return %c0_i32, %c0_i32_0, %c0_i32_1 : i32, i32, i32
  }
  func.func @transform_2(%arg0: i32) -> (i32, i32) {
    %c0_i32 = arith.constant 0 : i32
    %c0_i32_0 = arith.constant 0 : i32
    %c0_i32_1 = arith.constant 0 : i32
    return %c0_i32, %c0_i32_0 : i32, i32
  }
  func.func @transform_3(%arg0: i32) -> (i32, i32) {
    %c0_i32 = arith.constant 0 : i32
    %c0_i32_0 = arith.constant 0 : i32
    %c0_i32_1 = arith.constant 0 : i32
    return %c0_i32, %c0_i32_0 : i32, i32
  }
  func.func @transform_4(%arg0: i32) -> (i32, i32) {
    %c0_i32 = arith.constant 0 : i32
    %c0_i32_0 = arith.constant 0 : i32
    %c0_i32_1 = arith.constant 0 : i32
    return %c0_i32, %c0_i32_0 : i32, i32
  }
  func.func @transform_5(%arg0: i32) -> (i32, i32) {
    %c0_i32 = arith.constant 0 : i32
    %c0_i32_0 = arith.constant 0 : i32
    %c0_i32_1 = arith.constant 0 : i32
    return %c0_i32, %c0_i32_0 : i32, i32
  }
  func.func @transform_6(%arg0: i32) -> (i32, i32) {
    %c0_i32 = arith.constant 0 : i32
    %c0_i32_0 = arith.constant 0 : i32
    %c0_i32_1 = arith.constant 0 : i32
    return %c0_i32, %c0_i32_0 : i32, i32
  }
  func.func @transform_7(%arg0: i32) -> (i32, i32, i32) {
    %c0_i32 = arith.constant 0 : i32
    %c0_i32_0 = arith.constant 0 : i32
    %c0_i32_1 = arith.constant 0 : i32
    %c0_i32_2 = arith.constant 0 : i32
    return %c0_i32, %c0_i32_0, %c0_i32_1 : i32, i32, i32
  }
  func.func @transform_8(%arg0: i32) -> (i32, i32, i32) {
    %c0_i32 = arith.constant 0 : i32
    %c0_i32_0 = arith.constant 0 : i32
    %c0_i32_1 = arith.constant 0 : i32
    %c0_i32_2 = arith.constant 0 : i32
    return %c0_i32, %c0_i32_0, %c0_i32_1 : i32, i32, i32
  }
}

</mosaic_0001>

<llo_original>
// kernel: _lambda_.1
$region0: #{_lambda_.1}
  #allocation0 [shape = 'u32[]', space=smem, size = 0x4, offset = 0x4, fixed_abs, tag = 'smem constant byte address 0x4 - core index']
  #allocation1 [shape = 'u32[144,128]{1,0:T(1,128)}', space=vmem, size = 0x12000, scoped, tag = 'internal scratch']
  %s0 = inlined_call_operand.vmem [shape: f32[2,8,32], index: 0, kind: input, shape index: {}]
  %s1 = inlined_call_operand.vmem [shape: f32[2,8,8], index: 1, kind: input, shape index: {}]
  %s2 = inlined_call_operand.vmem [shape: bf16[32,96], index: 2, kind: input, shape index: {}]
  %s3 = inlined_call_operand.vmem [shape: bf16[32,32], index: 3, kind: input, shape index: {}]
  %s4 = inlined_call_operand.vmem [shape: bf16[32,64], index: 4, kind: input, shape index: {}]
  %s5 = inlined_call_operand.vmem [shape: bf16[64,32], index: 5, kind: input, shape index: {}]
  %s6 = inlined_call_operand.vmem [shape: f32[8,96], index: 6, kind: input, shape index: {}]
  %s7 = inlined_call_operand.hbm [shape: f32[2,8,32], index: 7, kind: output, shape index: {0}]
  %s8 = inlined_call_operand.vmem [shape: f32[2,8,32], index: 8, kind: output, shape index: {1}]
  %9 = xla_tuple %s7, %s8
  %s10 = sld [smem:[#allocation0]]
  $region46: #{_lambda_.1} parent=0
    _
  %s12 = ssub.s32 1, %s10
  %s13 = scalar_select 0, %s12, %s10
  $region1: #{_lambda_.1} parent=0
    #allocation2 [shape = 'u8[8192]{0}', space=vmem, size = 0x2000, scoped, tag = 'output window, operand 0, single buffered']
    #allocation3 [shape = 's32[1]{0}', space=sflag, size = 0x4, scoped, tag = 'scoped memory for _lambda_.1']
    %14 = vsyncpa [#allocation3], 0
    // Predicated region
    $region2: #{_lambda_.1} parent=1 // pred_check
      _
    $region3: #{_lambda_.1} parent=1 // pred_check_branch
      %16 = sbr.rel (0) target = $region5
    $region4: #{_lambda_.1} parent=1 // pred_region
      _
    $region5: #{_lambda_.1} parent=1 // pred_fallthru
      _
    // Predicated region
    $region6: #{_lambda_.1} parent=1 // pred_check
      _
    $region7: #{_lambda_.1} parent=1 // pred_check_branch
      %18 = sbr.rel (0) target = $region9
    $region8: #{_lambda_.1} parent=1 // pred_region
      _
    $region9: #{_lambda_.1} parent=1 // pred_fallthru
      _
    // Predicated region
    $region10: #{_lambda_.1} parent=1 // pred_check
      _
    $region11: #{_lambda_.1} parent=1 // pred_check_branch
      %20 = sbr.rel (0) target = $region13
    $region12: #{_lambda_.1} parent=1 // pred_region
      _
    $region13: #{_lambda_.1} parent=1 // pred_fallthru
      _
    // Predicated region
    $region14: #{_lambda_.1} parent=1 // pred_check
      _
    $region15: #{_lambda_.1} parent=1 // pred_check_branch
      %22 = sbr.rel (0) target = $region17
    $region16: #{_lambda_.1} parent=1 // pred_region
      _
    $region17: #{_lambda_.1} parent=1 // pred_fallthru
      _
    // Predicated region
    $region18: #{_lambda_.1} parent=1 // pred_check
      _
    $region19: #{_lambda_.1} parent=1 // pred_check_branch
      %24 = sbr.rel (0) target = $region21
    $region20: #{_lambda_.1} parent=1 // pred_region
      _
    $region21: #{_lambda_.1} parent=1 // pred_fallthru
      _
    // Predicated region
    $region22: #{_lambda_.1} parent=1 // pred_check
      _
    $region23: #{_lambda_.1} parent=1 // pred_check_branch
      %26 = sbr.rel (0) target = $region25
    $region24: #{_lambda_.1} parent=1 // pred_region
      _
    $region25: #{_lambda_.1} parent=1 // pred_fallthru
      _
    // Predicated region
    $region26: #{_lambda_.1} parent=1 // pred_check
      _
    $region27: #{_lambda_.1} parent=1 // pred_check_branch
      %28 = sbr.rel (0) target = $region29
    $region28: #{_lambda_.1} parent=1 // pred_region
      _
    $region29: #{_lambda_.1} parent=1 // pred_fallthru
      _
    %v30 = vld [vmem:[%s0] sm:$0xff]
    %v31 = vld [vmem:[%s0 + $0x8] sm:$0xff]
    %v32 = vld [vmem:[%s1] sm:$0xff]
    %v33 = vld [vmem:[%s1 + $0x8] sm:$0xff]
    %v34 = vld [vmem:[%s6] sm:$0x1]
    %v35 = vld [vmem:[%s6 + $0x1] sm:$0x1]
    %v36 = vld [vmem:[%s6 + $0x2] sm:$0x1]
    %v37 = vld [vmem:[%s6 + $0x3] sm:$0x1]
    %v38 = vld [vmem:[%s6 + $0x4] sm:$0x1]
    %v39 = vld [vmem:[%s6 + $0x5] sm:$0x1]
    %v40 = vld [vmem:[%s6 + $0x6] sm:$0x1]
    %v41 = vld [vmem:[%s6 + $0x7] sm:$0x1]
    %v42 = vpack.c.bf16 %v31, %v30
    %v43 = vld [vmem:[%s2] sm:$0xf]
    %v44 = vld [vmem:[%s2 + $0x4] sm:$0xf]
    %v45 = vld [vmem:[%s2 + $0x8] sm:$0xf]
    %v46 = vld [vmem:[%s2 + $0xc] sm:$0xf]
    %v47 = vlaneseq
    %v48 = vshrl.u32 %v47, 7
    %v49 = vsub.s32 0, %v48
    %v50 = vrot.slane %v34, %v49
    %v55 = vunpack.c.l.b16 %v43
    %v56 = vunpack.c.l.b16 %v44
    %v57 = vunpack.c.l.b16 %v45
    %v58 = vunpack.c.l.b16 %v46
    %v59 = vpack.c.b16 %v56, %v55
    %v60 = vpack.c.b16 %v58, %v57
    %vm63 = vcmask 261120
    %v65 = vsel %vm63, %v42, 0
    %67 = vmatprep.subr.bf16.mxu0 0
    %68 = vmatpush1.bf16.msra.mxu0 %v59
    %69 = vmatprep.subr.bf16.mxu0 0
    %70 = vmatpush1.bf16.msra.mxu0 %v60
    %71 = vmatprep.subr.bf16.mxu0 0
    %72 = vmatpush1.bf16.msra.mxu0 0
    %73 = vmatprep.subr.bf16.mxu0 0
    %74 = vmatpush1.bf16.msra.mxu0 0
    %75 = vmatprep.subr.bf16.mxu0 0
    %76 = vmatpush1.bf16.msra.mxu0 0
    %77 = vmatprep.subr.bf16.mxu0 0
    %78 = vmatpush1.bf16.msra.mxu0 0
    %79 = vmatprep.subr.bf16.mxu0 0
    %80 = vmatpush1.bf16.msra.mxu0 0
    %81 = vmatprep.subr.bf16.mxu0 0
    %82 = vmatpush1.bf16.msra.mxu0 0
    %83 = vmatprep.subr.bf16.mxu0 0
    %84 = vmatpush1.bf16.msra.mxu0 0
    %85 = vmatprep.subr.bf16.mxu0 0
    %86 = vmatpush1.bf16.msra.mxu0 0
    %87 = vmatprep.subr.bf16.mxu0 0
    %88 = vmatpush1.bf16.msra.mxu0 0
    %89 = vmatprep.subr.bf16.mxu0 0
    %90 = vmatpush1.bf16.msra.mxu0 0
    %91 = vmatprep.subr.bf16.mxu0 0
    %92 = vmatpush1.bf16.msra.mxu0 0
    %93 = vmatprep.subr.bf16.mxu0 0
    %94 = vmatpush1.bf16.msra.mxu0 0
    %95 = vmatprep.subr.bf16.mxu0 0
    %96 = vmatpush1.bf16.msra.mxu0 0
    %97 = vmatprep.subr.bf16.mxu0 0
    %98 = vmatpush1.bf16.msra.mxu0 0
    %99 = vmatprep.mubr.bf16.mxu0 0
    %100 = vmatmul.mubr.bf16.gmra.mrb[0].mxu0 %v65
    %v101 = vpop.f32.mrb[0].mxu0
    %v102 = vadd.f32 %v50, %v101
    %v103 = vpop.f32.mrb[0].mxu0
    %v104 = vpop.f32.mrb[0].mxu0
    %v105 = vadd.f32 %v50, %v104
    %v106 = vpop.f32.mrb[0].mxu0
    %107 = vdwg.mxu0
    %v108 = vpack.c.bf16 %v102, %v102
    %v109 = vpack.c.bf16 %v105, %v105
    %111 = vrot.lane.b32.xlu0 %v108, 96
    %v112 = vpop.permute.xlu0 %111
    %vm113 = vcmask 64512
    %v115 = vsel %vm113, %v108, 0
    %v118 = vsel %vm113, %v112, 0
    %120 = vmatprep.subr.bf16.mxu0 0
    %121 = vmatpush1.bf16.xpose.msra.mxu0 %v118
    %122 = vmatprep.subr.bf16.mxu0 0
    %123 = vmatpush1.bf16.xpose.msra.mxu0 0
    %124 = vmatprep.subr.bf16.mxu0 0
    %125 = vmatpush1.bf16.xpose.msra.mxu0 0
    %126 = vmatprep.subr.bf16.mxu0 0
    %127 = vmatpush1.bf16.xpose.msra.mxu0 0
    %128 = vmatprep.subr.bf16.mxu0 0
    %129 = vmatpush1.bf16.xpose.msra.mxu0 0
    %130 = vmatprep.subr.bf16.mxu0 0
    %131 = vmatpush1.bf16.xpose.msra.mxu0 0
    %132 = vmatprep.subr.bf16.mxu0 0
    %133 = vmatpush1.bf16.xpose.msra.mxu0 0
    %134 = vmatprep.subr.bf16.mxu0 0
    %135 = vmatpush1.bf16.xpose.msra.mxu0 0
    %136 = vmatprep.subr.bf16.mxu0 0
    %137 = vmatpush1.bf16.xpose.msra.mxu0 0
    %138 = vmatprep.subr.bf16.mxu0 0
    %139 = vmatpush1.bf16.xpose.msra.mxu0 0
    %140 = vmatprep.subr.bf16.mxu0 0
    %141 = vmatpush1.bf16.xpose.msra.mxu0 0
    %142 = vmatprep.subr.bf16.mxu0 0
    %143 = vmatpush1.bf16.xpose.msra.mxu0 0
    %144 = vmatprep.subr.bf16.mxu0 0
    %145 = vmatpush1.bf16.xpose.msra.mxu0 0
    %146 = vmatprep.subr.bf16.mxu0 0
    %147 = vmatpush1.bf16.xpose.msra.mxu0 0
    %148 = vmatprep.subr.bf16.mxu0 0
    %149 = vmatpush1.bf16.xpose.msra.mxu0 0
    %150 = vmatprep.subr.bf16.mxu0 0
    %151 = vmatpush1.bf16.xpose.msra.mxu0 0
    %152 = vmatprep.mubr.bf16.mxu0 0
    %153 = vmatmul.mubr.bf16.gmra.mrb[0].mxu0 %v115
    %v154 = vpop.f32.mrb[0].mxu0
    %v155 = vadd.f32 %v32, %v154
    %v156 = vpop.f32.mrb[0].mxu0
    %v157 = vpop.f32.mrb[0].mxu0
    %v158 = vpop.f32.mrb[0].mxu0
    %159 = vdwg.mxu0
    %161 = vrot.lane.b32.xlu0 %v109, 96
    %v162 = vpop.permute.xlu0 %161
    %v164 = vsel %vm113, %v109, 0
    %v167 = vsel %vm113, %v162, 0
    %169 = vmatprep.subr.bf16.mxu0 0
    %170 = vmatpush1.bf16.xpose.msra.mxu0 %v167
    %171 = vmatprep.subr.bf16.mxu0 0
    %172 = vmatpush1.bf16.xpose.msra.mxu0 0
    %173 = vmatprep.subr.bf16.mxu0 0
    %174 = vmatpush1.bf16.xpose.msra.mxu0 0
    %175 = vmatprep.subr.bf16.mxu0 0
    %176 = vmatpush1.bf16.xpose.msra.mxu0 0
    %177 = vmatprep.subr.bf16.mxu0 0
    %178 = vmatpush1.bf16.xpose.msra.mxu0 0
    %179 = vmatprep.subr.bf16.mxu0 0
    %180 = vmatpush1.bf16.xpose.msra.mxu0 0
    %181 = vmatprep.subr.bf16.mxu0 0
    %182 = vmatpush1.bf16.xpose.msra.mxu0 0
    %183 = vmatprep.subr.bf16.mxu0 0
    %184 = vmatpush1.bf16.xpose.msra.mxu0 0
    %185 = vmatprep.subr.bf16.mxu0 0
    %186 = vmatpush1.bf16.xpose.msra.mxu0 0
    %187 = vmatprep.subr.bf16.mxu0 0
    %188 = vmatpush1.bf16.xpose.msra.mxu0 0
    %189 = vmatprep.subr.bf16.mxu0 0
    %190 = vmatpush1.bf16.xpose.msra.mxu0 0
    %191 = vmatprep.subr.bf16.mxu0 0
    %192 = vmatpush1.bf16.xpose.msra.mxu0 0
    %193 = vmatprep.subr.bf16.mxu0 0
    %194 = vmatpush1.bf16.xpose.msra.mxu0 0
    %195 = vmatprep.subr.bf16.mxu0 0
    %196 = vmatpush1.bf16.xpose.msra.mxu0 0
    %197 = vmatprep.subr.bf16.mxu0 0
    %198 = vmatpush1.bf16.xpose.msra.mxu0 0
    %199 = vmatprep.subr.bf16.mxu0 0
    %200 = vmatpush1.bf16.xpose.msra.mxu0 0
    %201 = vmatprep.mubr.bf16.mxu0 0
    %202 = vmatmul.mubr.bf16.gmra.mrb[0].mxu0 %v164
    %v203 = vpop.f32.mrb[0].mxu0
    %v204 = vadd.f32 %v33, %v203
    %v205 = vpop.f32.mrb[0].mxu0
    %v206 = vpop.f32.mrb[0].mxu0
    %v207 = vpop.f32.mrb[0].mxu0
    %208 = vdwg.mxu0
    %v209 = vsel %vm113, %v155, -inf
    %210 = vmax.xlane.f32.xlu0 %v209
    %v211 = vpop.xlane.xlu0 %210
    %v212 = vsel %vm113, %v204, -inf
    %213 = vmax.xlane.f32.xlu0 %v212
    %v214 = vpop.xlane.xlu0 %213
    %v215 = vsub.f32 %v155, %v211
    %v216 = vsub.f32 %v204, %v214
    %v217 = vmul.f32 %v215, 1.442695
    %v218 = vpow.pop %v217
    %v219 = vmul.f32 %v216, 1.442695
    %v220 = vpow.pop %v219
    %v221 = vsel %vm113, %v218, 0.0
    %222 = vadd.xlane.f32.xlu0 %v221
    %v223 = vpop.xlane.xlu0 %222
    %v224 = vsel %vm113, %v220, 0.0
    %225 = vadd.xlane.f32.xlu0 %v224
    %v226 = vpop.xlane.xlu0 %225
    %v227 = vrcp.pop %v223
    %v228 = vmul.f32 %v218, %v227
    %v229 = vrcp.pop %v226
    %v230 = vmul.f32 %v220, %v229
    %v231 = vpack.c.bf16 %v228, %v228
    %v232 = vpack.c.bf16 %v230, %v230
    %233 = vrot.lane.b32.xlu0 %v108, 64
    %v234 = vpop.permute.xlu0 %233
    %v236 = vsel %vm113, %v231, 0
    %vm238 = vcmask 1043456
    %v240 = vsel %vm238, %v234, 0
    %242 = vmatprep.subr.bf16.mxu0 0
    %243 = vmatpush1.bf16.msra.mxu0 %v240
    %244 = vmatprep.subr.bf16.mxu0 0
    %245 = vmatpush1.bf16.msra.mxu0 0
    %246 = vmatprep.subr.bf16.mxu0 0
    %247 = vmatpush1.bf16.msra.mxu0 0
    %248 = vmatprep.subr.bf16.mxu0 0
    %249 = vmatpush1.bf16.msra.mxu0 0
    %250 = vmatprep.subr.bf16.mxu0 0
    %251 = vmatpush1.bf16.msra.mxu0 0
    %252 = vmatprep.subr.bf16.mxu0 0
    %253 = vmatpush1.bf16.msra.mxu0 0
    %254 = vmatprep.subr.bf16.mxu0 0
    %255 = vmatpush1.bf16.msra.mxu0 0
    %256 = vmatprep.subr.bf16.mxu0 0
    %257 = vmatpush1.bf16.msra.mxu0 0
    %258 = vmatprep.subr.bf16.mxu0 0
    %259 = vmatpush1.bf16.msra.mxu0 0
    %260 = vmatprep.subr.bf16.mxu0 0
    %261 = vmatpush1.bf16.msra.mxu0 0
    %262 = vmatprep.subr.bf16.mxu0 0
    %263 = vmatpush1.bf16.msra.mxu0 0
    %264 = vmatprep.subr.bf16.mxu0 0
    %265 = vmatpush1.bf16.msra.mxu0 0
    %266 = vmatprep.subr.bf16.mxu0 0
    %267 = vmatpush1.bf16.msra.mxu0 0
    %268 = vmatprep.subr.bf16.mxu0 0
    %269 = vmatpush1.bf16.msra.mxu0 0
    %270 = vmatprep.subr.bf16.mxu0 0
    %271 = vmatpush1.bf16.msra.mxu0 0
    %272 = vmatprep.subr.bf16.mxu0 0
    %273 = vmatpush1.bf16.msra.mxu0 0
    %274 = vmatprep.mubr.bf16.mxu0 0
    %275 = vmatmul.mubr.bf16.gmra.mrb[0].mxu0 %v236
    %v276 = vpop.f32.mrb[0].mxu0
    %v277 = vadd.f32 0.0, %v276
    %v278 = vpop.f32.mrb[0].mxu0
    %v279 = vpop.f32.mrb[0].mxu0
    %v280 = vpop.f32.mrb[0].mxu0
    %281 = vdwg.mxu0
    %282 = vrot.lane.b32.xlu0 %v109, 64
    %v283 = vpop.permute.xlu0 %282
    %v285 = vsel %vm113, %v232, 0
    %v288 = vsel %vm238, %v283, 0
    %290 = vmatprep.subr.bf16.mxu0 0
    %291 = vmatpush1.bf16.msra.mxu0 %v288
    %292 = vmatprep.subr.bf16.mxu0 0
    %293 = vmatpush1.bf16.msra.mxu0 0
    %294 = vmatprep.subr.bf16.mxu0 0
    %295 = vmatpush1.bf16.msra.mxu0 0
    %296 = vmatprep.subr.bf16.mxu0 0
    %297 = vmatpush1.bf16.msra.mxu0 0
    %298 = vmatprep.subr.bf16.mxu0 0
    %299 = vmatpush1.bf16.msra.mxu0 0
    %300 = vmatprep.subr.bf16.mxu0 0
    %301 = vmatpush1.bf16.msra.mxu0 0
    %302 = vmatprep.subr.bf16.mxu0 0
    %303 = vmatpush1.bf16.msra.mxu0 0
    %304 = vmatprep.subr.bf16.mxu0 0
    %305 = vmatpush1.bf16.msra.mxu0 0
    %306 = vmatprep.subr.bf16.mxu0 0
    %307 = vmatpush1.bf16.msra.mxu0 0
    %308 = vmatprep.subr.bf16.mxu0 0
    %309 = vmatpush1.bf16.msra.mxu0 0
    %310 = vmatprep.subr.bf16.mxu0 0
    %311 = vmatpush1.bf16.msra.mxu0 0
    %312 = vmatprep.subr.bf16.mxu0 0
    %313 = vmatpush1.bf16.msra.mxu0 0
    %314 = vmatprep.subr.bf16.mxu0 0
    %315 = vmatpush1.bf16.msra.mxu0 0
    %316 = vmatprep.subr.bf16.mxu0 0
    %317 = vmatpush1.bf16.msra.mxu0 0
    %318 = vmatprep.subr.bf16.mxu0 0
    %319 = vmatpush1.bf16.msra.mxu0 0
    %320 = vmatprep.subr.bf16.mxu0 0
    %321 = vmatpush1.bf16.msra.mxu0 0
    %322 = vmatprep.mubr.bf16.mxu0 0
    %323 = vmatmul.mubr.bf16.gmra.mrb[0].mxu0 %v285
    %v324 = vpop.f32.mrb[0].mxu0
    %v325 = vadd.f32 0.0, %v324
    %v326 = vpop.f32.mrb[0].mxu0
    %v327 = vpop.f32.mrb[0].mxu0
    %v328 = vpop.f32.mrb[0].mxu0
    %329 = vdwg.mxu0
    %330 = vrot.lane.b32.xlu0 %v108, 120
    %v331 = vpop.permute.xlu0 %330
    %332 = vrot.lane.b32.xlu0 %v108, 88
    %v333 = vpop.permute.xlu0 %332
    %v335 = vsel %vm113, %v331, 0
    %v338 = vsel %vm113, %v333, 0
    %340 = vmatprep.subr.bf16.mxu0 0
    %341 = vmatpush1.bf16.xpose.msra.mxu0 %v338
    %342 = vmatprep.subr.bf16.mxu0 0
    %343 = vmatpush1.bf16.xpose.msra.mxu0 0
    %344 = vmatprep.subr.bf16.mxu0 0
    %345 = vmatpush1.bf16.xpose.msra.mxu0 0
    %346 = vmatprep.subr.bf16.mxu0 0
    %347 = vmatpush1.bf16.xpose.msra.mxu0 0
    %348 = vmatprep.subr.bf16.mxu0 0
    %349 = vmatpush1.bf16.xpose.msra.mxu0 0
    %350 = vmatprep.subr.bf16.mxu0 0
    %351 = vmatpush1.bf16.xpose.msra.mxu0 0
    %352 = vmatprep.subr.bf16.mxu0 0
    %353 = vmatpush1.bf16.xpose.msra.mxu0 0
    %354 = vmatprep.subr.bf16.mxu0 0
    %355 = vmatpush1.bf16.xpose.msra.mxu0 0
    %356 = vmatprep.subr.bf16.mxu0 0
    %357 = vmatpush1.bf16.xpose.msra.mxu0 0
    %358 = vmatprep.subr.bf16.mxu0 0
    %359 = vmatpush1.bf16.xpose.msra.mxu0 0
    %360 = vmatprep.subr.bf16.mxu0 0
    %361 = vmatpush1.bf16.xpose.msra.mxu0 0
    %362 = vmatprep.subr.bf16.mxu0 0
    %363 = vmatpush1.bf16.xpose.msra.mxu0 0
    %364 = vmatprep.subr.bf16.mxu0 0
    %365 = vmatpush1.bf16.xpose.msra.mxu0 0
    %366 = vmatprep.subr.bf16.mxu0 0
    %367 = vmatpush1.bf16.xpose.msra.mxu0 0
    %368 = vmatprep.subr.bf16.mxu0 0
    %369 = vmatpush1.bf16.xpose.msra.mxu0 0
    %370 = vmatprep.subr.bf16.mxu0 0
    %371 = vmatpush1.bf16.xpose.msra.mxu0 0
    %372 = vmatprep.mubr.bf16.mxu0 0
    %373 = vmatmul.mubr.bf16.gmra.mrb[0].mxu0 %v335
    %v374 = vpop.f32.mrb[0].mxu0
    %v375 = vadd.f32 %v32, %v374
    %v376 = vpop.f32.mrb[0].mxu0
    %v377 = vpop.f32.mrb[0].mxu0
    %v378 = vpop.f32.mrb[0].mxu0
    %379 = vdwg.mxu0
    %380 = vrot.lane.b32.xlu0 %v109, 120
    %v381 = vpop.permute.xlu0 %380
    %382 = vrot.lane.b32.xlu0 %v109, 88
    %v383 = vpop.permute.xlu0 %382
    %v385 = vsel %vm113, %v381, 0
    %v388 = vsel %vm113, %v383, 0
    %390 = vmatprep.subr.bf16.mxu0 0
    %391 = vmatpush1.bf16.xpose.msra.mxu0 %v388
    %392 = vmatprep.subr.bf16.mxu0 0
    %393 = vmatpush1.bf16.xpose.msra.mxu0 0
    %394 = vmatprep.subr.bf16.mxu0 0
    %395 = vmatpush1.bf16.xpose.msra.mxu0 0
    %396 = vmatprep.subr.bf16.mxu0 0
    %397 = vmatpush1.bf16.xpose.msra.mxu0 0
    %398 = vmatprep.subr.bf16.mxu0 0
    %399 = vmatpush1.bf16.xpose.msra.mxu0 0
    %400 = vmatprep.subr.bf16.mxu0 0
    %401 = vmatpush1.bf16.xpose.msra.mxu0 0
    %402 = vmatprep.subr.bf16.mxu0 0
    %403 = vmatpush1.bf16.xpose.msra.mxu0 0
    %404 = vmatprep.subr.bf16.mxu0 0
    %405 = vmatpush1.bf16.xpose.msra.mxu0 0
    %406 = vmatprep.subr.bf16.mxu0 0
    %407 = vmatpush1.bf16.xpose.msra.mxu0 0
    %408 = vmatprep.subr.bf16.mxu0 0
    %409 = vmatpush1.bf16.xpose.msra.mxu0 0
    %410 = vmatprep.subr.bf16.mxu0 0
    %411 = vmatpush1.bf16.xpose.msra.mxu0 0
    %412 = vmatprep.subr.bf16.mxu0 0
    %413 = vmatpush1.bf16.xpose.msra.mxu0 0
    %414 = vmatprep.subr.bf16.mxu0 0
    %415 = vmatpush1.bf16.xpose.msra.mxu0 0
    %416 = vmatprep.subr.bf16.mxu0 0
    %417 = vmatpush1.bf16.xpose.msra.mxu0 0
    %418 = vmatprep.subr.bf16.mxu0 0
    %419 = vmatpush1.bf16.xpose.msra.mxu0 0
    %420 = vmatprep.subr.bf16.mxu0 0
    %421 = vmatpush1.bf16.xpose.msra.mxu0 0
    %422 = vmatprep.mubr.bf16.mxu0 0
    %423 = vmatmul.mubr.bf16.gmra.mrb[0].mxu0 %v385
    %v424 = vpop.f32.mrb[0].mxu0
    %v425 = vadd.f32 %v33, %v424
    %v426 = vpop.f32.mrb[0].mxu0
    %v427 = vpop.f32.mrb[0].mxu0
    %v428 = vpop.f32.mrb[0].mxu0
    %429 = vdwg.mxu0
    %v430 = vsel %vm113, %v375, -inf
    %431 = vmax.xlane.f32.xlu0 %v430
    %v432 = vpop.xlane.xlu0 %431
    %v433 = vsel %vm113, %v425, -inf
    %434 = vmax.xlane.f32.xlu0 %v433
    %v435 = vpop.xlane.xlu0 %434
    %v436 = vsub.f32 %v375, %v432
    %v437 = vsub.f32 %v425, %v435
    %v438 = vmul.f32 %v436, 1.442695
    %v439 = vpow.pop %v438
    %v440 = vmul.f32 %v437, 1.442695
    %v441 = vpow.pop %v440
    %v442 = vsel %vm113, %v439, 0.0
    %443 = vadd.xlane.f32.xlu0 %v442
    %v444 = vpop.xlane.xlu0 %443
    %v445 = vsel %vm113, %v441, 0.0
    %446 = vadd.xlane.f32.xlu0 %v445
    %v447 = vpop.xlane.xlu0 %446
    %v448 = vrcp.pop %v444
    %v449 = vmul.f32 %v439, %v448
    %v450 = vrcp.pop %v447
    %v451 = vmul.f32 %v441, %v450
    %v452 = vpack.c.bf16 %v449, %v449
    %v453 = vpack.c.bf16 %v451, %v451
    %454 = vrot.lane.b32.xlu0 %v108, 56
    %v455 = vpop.permute.xlu0 %454
    %v457 = vsel %vm113, %v452, 0
    %v460 = vsel %vm238, %v455, 0
    %462 = vmatprep.subr.bf16.mxu0 0
    %463 = vmatpush1.bf16.msra.mxu0 %v460
    %464 = vmatprep.subr.bf16.mxu0 0
    %465 = vmatpush1.bf16.msra.mxu0 0
    %466 = vmatprep.subr.bf16.mxu0 0
    %467 = vmatpush1.bf16.msra.mxu0 0
    %468 = vmatprep.subr.bf16.mxu0 0
    %469 = vmatpush1.bf16.msra.mxu0 0
    %470 = vmatprep.subr.bf16.mxu0 0
    %471 = vmatpush1.bf16.msra.mxu0 0
    %472 = vmatprep.subr.bf16.mxu0 0
    %473 = vmatpush1.bf16.msra.mxu0 0
    %474 = vmatprep.subr.bf16.mxu0 0
    %475 = vmatpush1.bf16.msra.mxu0 0
    %476 = vmatprep.subr.bf16.mxu0 0
    %477 = vmatpush1.bf16.msra.mxu0 0
    %478 = vmatprep.subr.bf16.mxu0 0
    %479 = vmatpush1.bf16.msra.mxu0 0
    %480 = vmatprep.subr.bf16.mxu0 0
    %481 = vmatpush1.bf16.msra.mxu0 0
    %482 = vmatprep.subr.bf16.mxu0 0
    %483 = vmatpush1.bf16.msra.mxu0 0
    %484 = vmatprep.subr.bf16.mxu0 0
    %485 = vmatpush1.bf16.msra.mxu0 0
    %486 = vmatprep.subr.bf16.mxu0 0
    %487 = vmatpush1.bf16.msra.mxu0 0
    %488 = vmatprep.subr.bf16.mxu0 0
    %489 = vmatpush1.bf16.msra.mxu0 0
    %490 = vmatprep.subr.bf16.mxu0 0
    %491 = vmatpush1.bf16.msra.mxu0 0
    %492 = vmatprep.subr.bf16.mxu0 0
    %493 = vmatpush1.bf16.msra.mxu0 0
    %494 = vmatprep.mubr.bf16.mxu0 0
    %495 = vmatmul.mubr.bf16.gmra.mrb[0].mxu0 %v457
    %v496 = vpop.f32.mrb[0].mxu0
    %v497 = vadd.f32 0.0, %v496
    %v498 = vpop.f32.mrb[0].mxu0
    %v499 = vpop.f32.mrb[0].mxu0
    %v500 = vpop.f32.mrb[0].mxu0
    %501 = vdwg.mxu0
    %502 = vrot.lane.b32.xlu0 %v109, 56
    %v503 = vpop.permute.xlu0 %502
    %v505 = vsel %vm113, %v453, 0
    %v508 = vsel %vm238, %v503, 0
    %510 = vmatprep.subr.bf16.mxu0 0
    %511 = vmatpush1.bf16.msra.mxu0 %v508
    %512 = vmatprep.subr.bf16.mxu0 0
    %513 = vmatpush1.bf16.msra.mxu0 0
    %514 = vmatprep.subr.bf16.mxu0 0
    %515 = vmatpush1.bf16.msra.mxu0 0
    %516 = vmatprep.subr.bf16.mxu0 0
    %517 = vmatpush1.bf16.msra.mxu0 0
    %518 = vmatprep.subr.bf16.mxu0 0
    %519 = vmatpush1.bf16.msra.mxu0 0
    %520 = vmatprep.subr.bf16.mxu0 0
    %521 = vmatpush1.bf16.msra.mxu0 0
    %522 = vmatprep.subr.bf16.mxu0 0
    %523 = vmatpush1.bf16.msra.mxu0 0
    %524 = vmatprep.subr.bf16.mxu0 0
    %525 = vmatpush1.bf16.msra.mxu0 0
    %526 = vmatprep.subr.bf16.mxu0 0
    %527 = vmatpush1.bf16.msra.mxu0 0
    %528 = vmatprep.subr.bf16.mxu0 0
    %529 = vmatpush1.bf16.msra.mxu0 0
    %530 = vmatprep.subr.bf16.mxu0 0
    %531 = vmatpush1.bf16.msra.mxu0 0
    %532 = vmatprep.subr.bf16.mxu0 0
    %533 = vmatpush1.bf16.msra.mxu0 0
    %534 = vmatprep.subr.bf16.mxu0 0
    %535 = vmatpush1.bf16.msra.mxu0 0
    %536 = vmatprep.subr.bf16.mxu0 0
    %537 = vmatpush1.bf16.msra.mxu0 0
    %538 = vmatprep.subr.bf16.mxu0 0
    %539 = vmatpush1.bf16.msra.mxu0 0
    %540 = vmatprep.subr.bf16.mxu0 0
    %541 = vmatpush1.bf16.msra.mxu0 0
    %542 = vmatprep.mubr.bf16.mxu0 0
    %543 = vmatmul.mubr.bf16.gmra.mrb[0].mxu0 %v505
    %v544 = vpop.f32.mrb[0].mxu0
    %v545 = vadd.f32 0.0, %v544
    %v546 = vpop.f32.mrb[0].mxu0
    %v547 = vpop.f32.mrb[0].mxu0
    %v548 = vpop.f32.mrb[0].mxu0
    %549 = vdwg.mxu0
    %550 = vrot.lane.b32.xlu0 %v108, 112
    %v551 = vpop.permute.xlu0 %550
    %552 = vrot.lane.b32.xlu0 %v108, 80
    %v553 = vpop.permute.xlu0 %552
    %v555 = vsel %vm113, %v551, 0
    %v558 = vsel %vm113, %v553, 0
    %560 = vmatprep.subr.bf16.mxu0 0
    %561 = vmatpush1.bf16.xpose.msra.mxu0 %v558
    %562 = vmatprep.subr.bf16.mxu0 0
    %563 = vmatpush1.bf16.xpose.msra.mxu0 0
    %564 = vmatprep.subr.bf16.mxu0 0
    %565 = vmatpush1.bf16.xpose.msra.mxu0 0
    %566 = vmatprep.subr.bf16.mxu0 0
    %567 = vmatpush1.bf16.xpose.msra.mxu0 0
    %568 = vmatprep.subr.bf16.mxu0 0
    %569 = vmatpush1.bf16.xpose.msra.mxu0 0
    %570 = vmatprep.subr.bf16.mxu0 0
    %571 = vmatpush1.bf16.xpose.msra.mxu0 0
    %572 = vmatprep.subr.bf16.mxu0 0
    %573 = vmatpush1.bf16.xpose.msra.mxu0 0
    %574 = vmatprep.subr.bf16.mxu0 0
    %575 = vmatpush1.bf16.xpose.msra.mxu0 0
    %576 = vmatprep.subr.bf16.mxu0 0
    %577 = vmatpush1.bf16.xpose.msra.mxu0 0
    %578 = vmatprep.subr.bf16.mxu0 0
    %579 = vmatpush1.bf16.xpose.msra.mxu0 0
    %580 = vmatprep.subr.bf16.mxu0 0
    %581 = vmatpush1.bf16.xpose.msra.mxu0 0
    %582 = vmatprep.subr.bf16.mxu0 0
    %583 = vmatpush1.bf16.xpose.msra.mxu0 0
    %584 = vmatprep.subr.bf16.mxu0 0
    %585 = vmatpush1.bf16.xpose.msra.mxu0 0
    %586 = vmatprep.subr.bf16.mxu0 0
    %587 = vmatpush1.bf16.xpose.msra.mxu0 0
    %588 = vmatprep.subr.bf16.mxu0 0
    %589 = vmatpush1.bf16.xpose.msra.mxu0 0
    %590 = vmatprep.subr.bf16.mxu0 0
    %591 = vmatpush1.bf16.xpose.msra.mxu0 0
    %592 = vmatprep.mubr.bf16.mxu0 0
    %593 = vmatmul.mubr.bf16.gmra.mrb[0].mxu0 %v555
    %v594 = vpop.f32.mrb[0].mxu0
    %v595 = vadd.f32 %v32, %v594
    %v596 = vpop.f32.mrb[0].mxu0
    %v597 = vpop.f32.mrb[0].mxu0
    %v598 = vpop.f32.mrb[0].mxu0
    %599 = vdwg.mxu0
    %600 = vrot.lane.b32.xlu0 %v109, 112
    %v601 = vpop.permute.xlu0 %600
    %602 = vrot.lane.b32.xlu0 %v109, 80
    %v603 = vpop.permute.xlu0 %602
    %v605 = vsel %vm113, %v601, 0
    %v608 = vsel %vm113, %v603, 0
    %610 = vmatprep.subr.bf16.mxu0 0
    %611 = vmatpush1.bf16.xpose.msra.mxu0 %v608
    %612 = vmatprep.subr.bf16.mxu0 0
    %613 = vmatpush1.bf16.xpose.msra.mxu0 0
    %614 = vmatprep.subr.bf16.mxu0 0
    %615 = vmatpush1.bf16.xpose.msra.mxu0 0
    %616 = vmatprep.subr.bf16.mxu0 0
    %617 = vmatpush1.bf16.xpose.msra.mxu0 0
    %618 = vmatprep.subr.bf16.mxu0 0
    %619 = vmatpush1.bf16.xpose.msra.mxu0 0
    %620 = vmatprep.subr.bf16.mxu0 0
    %621 = vmatpush1.bf16.xpose.msra.mxu0 0
    %622 = vmatprep.subr.bf16.mxu0 0
    %623 = vmatpush1.bf16.xpose.msra.mxu0 0
    %624 = vmatprep.subr.bf16.mxu0 0
    %625 = vmatpush1.bf16.xpose.msra.mxu0 0
    %626 = vmatprep.subr.bf16.mxu0 0
    %627 = vmatpush1.bf16.xpose.msra.mxu0 0
    %628 = vmatprep.subr.bf16.mxu0 0
    %629 = vmatpush1.bf16.xpose.msra.mxu0 0
    %630 = vmatprep.subr.bf16.mxu0 0
    %631 = vmatpush1.bf16.xpose.msra.mxu0 0
    %632 = vmatprep.subr.bf16.mxu0 0
    %633 = vmatpush1.bf16.xpose.msra.mxu0 0
    %634 = vmatprep.subr.bf16.mxu0 0
    %635 = vmatpush1.bf16.xpose.msra.mxu0 0
    %636 = vmatprep.subr.bf16.mxu0 0
    %637 = vmatpush1.bf16.xpose.msra.mxu0 0
    %638 = vmatprep.subr.bf16.mxu0 0
    %639 = vmatpush1.bf16.xpose.msra.mxu0 0
    %640 = vmatprep.subr.bf16.mxu0 0
    %641 = vmatpush1.bf16.xpose.msra.mxu0 0
    %642 = vmatprep.mubr.bf16.mxu0 0
    %643 = vmatmul.mubr.bf16.gmra.mrb[0].mxu0 %v605
    %v644 = vpop.f32.mrb[0].mxu0
    %v645 = vadd.f32 %v33, %v644
    %v646 = vpop.f32.mrb[0].mxu0
    %v647 = vpop.f32.mrb[0].mxu0
    %v648 = vpop.f32.mrb[0].mxu0
    %649 = vdwg.mxu0
    %v650 = vsel %vm113, %v595, -inf
    %651 = vmax.xlane.f32.xlu0 %v650
    %v652 = vpop.xlane.xlu0 %651
    %v653 = vsel %vm113, %v645, -inf
    %654 = vmax.xlane.f32.xlu0 %v653
    %v655 = vpop.xlane.xlu0 %654
    %v656 = vsub.f32 %v595, %v652
    %v657 = vsub.f32 %v645, %v655
    %v658 = vmul.f32 %v656, 1.442695
    %v659 = vpow.pop %v658
    %v660 = vmul.f32 %v657, 1.442695
    %v661 = vpow.pop %v660
    %v662 = vsel %vm113, %v659, 0.0
    %663 = vadd.xlane.f32.xlu0 %v662
    %v664 = vpop.xlane.xlu0 %663
    %v665 = vsel %vm113, %v661, 0.0
    %666 = vadd.xlane.f32.xlu0 %v665
    %v667 = vpop.xlane.xlu0 %666
    %v668 = vrcp.pop %v664
    %v669 = vmul.f32 %v659, %v668
    %v670 = vrcp.pop %v667
    %v671 = vmul.f32 %v661, %v670
    %v672 = vpack.c.bf16 %v669, %v669
    %v673 = vpack.c.bf16 %v671, %v671
    %674 = vrot.lane.b32.xlu0 %v108, 48
    %v675 = vpop.permute.xlu0 %674
    %v677 = vsel %vm113, %v672, 0
    %v680 = vsel %vm238, %v675, 0
    %682 = vmatprep.subr.bf16.mxu0 0
    %683 = vmatpush1.bf16.msra.mxu0 %v680
    %684 = vmatprep.subr.bf16.mxu0 0
    %685 = vmatpush1.bf16.msra.mxu0 0
    %686 = vmatprep.subr.bf16.mxu0 0
    %687 = vmatpush1.bf16.msra.mxu0 0
    %688 = vmatprep.subr.bf16.mxu0 0
    %689 = vmatpush1.bf16.msra.mxu0 0
    %690 = vmatprep.subr.bf16.mxu0 0
    %691 = vmatpush1.bf16.msra.mxu0 0
    %692 = vmatprep.subr.bf16.mxu0 0
    %693 = vmatpush1.bf16.msra.mxu0 0
    %694 = vmatprep.subr.bf16.mxu0 0
    %695 = vmatpush1.bf16.msra.mxu0 0
    %696 = vmatprep.subr.bf16.mxu0 0
    %697 = vmatpush1.bf16.msra.mxu0 0
    %698 = vmatprep.subr.bf16.mxu0 0
    %699 = vmatpush1.bf16.msra.mxu0 0
    %700 = vmatprep.subr.bf16.mxu0 0
    %701 = vmatpush1.bf16.msra.mxu0 0
    %702 = vmatprep.subr.bf16.mxu0 0
    %703 = vmatpush1.bf16.msra.mxu0 0
    %704 = vmatprep.subr.bf16.mxu0 0
    %705 = vmatpush1.bf16.msra.mxu0 0
    %706 = vmatprep.subr.bf16.mxu0 0
    %707 = vmatpush1.bf16.msra.mxu0 0
    %708 = vmatprep.subr.bf16.mxu0 0
    %709 = vmatpush1.bf16.msra.mxu0 0
    %710 = vmatprep.subr.bf16.mxu0 0
    %711 = vmatpush1.bf16.msra.mxu0 0
    %712 = vmatprep.subr.bf16.mxu0 0
    %713 = vmatpush1.bf16.msra.mxu0 0
    %714 = vmatprep.mubr.bf16.mxu0 0
    %715 = vmatmul.mubr.bf16.gmra.mrb[0].mxu0 %v677
    %v716 = vpop.f32.mrb[0].mxu0
    %v717 = vadd.f32 0.0, %v716
    %v718 = vpop.f32.mrb[0].mxu0
    %v719 = vpop.f32.mrb[0].mxu0
    %v720 = vpop.f32.mrb[0].mxu0
    %721 = vdwg.mxu0
    %722 = vrot.lane.b32.xlu0 %v109, 48
    %v723 = vpop.permute.xlu0 %722
    %v725 = vsel %vm113, %v673, 0
    %v728 = vsel %vm238, %v723, 0
    %730 = vmatprep.subr.bf16.mxu0 0
    %731 = vmatpush1.bf16.msra.mxu0 %v728
    %732 = vmatprep.subr.bf16.mxu0 0
    %733 = vmatpush1.bf16.msra.mxu0 0
    %734 = vmatprep.subr.bf16.mxu0 0
    %735 = vmatpush1.bf16.msra.mxu0 0
    %736 = vmatprep.subr.bf16.mxu0 0
    %737 = vmatpush1.bf16.msra.mxu0 0
    %738 = vmatprep.subr.bf16.mxu0 0
    %739 = vmatpush1.bf16.msra.mxu0 0
    %740 = vmatprep.subr.bf16.mxu0 0
    %741 = vmatpush1.bf16.msra.mxu0 0
    %742 = vmatprep.subr.bf16.mxu0 0
    %743 = vmatpush1.bf16.msra.mxu0 0
    %744 = vmatprep.subr.bf16.mxu0 0
    %745 = vmatpush1.bf16.msra.mxu0 0
    %746 = vmatprep.subr.bf16.mxu0 0
    %747 = vmatpush1.bf16.msra.mxu0 0
    %748 = vmatprep.subr.bf16.mxu0 0
    %749 = vmatpush1.bf16.msra.mxu0 0
    %750 = vmatprep.subr.bf16.mxu0 0
    %751 = vmatpush1.bf16.msra.mxu0 0
    %752 = vmatprep.subr.bf16.mxu0 0
    %753 = vmatpush1.bf16.msra.mxu0 0
    %754 = vmatprep.subr.bf16.mxu0 0
    %755 = vmatpush1.bf16.msra.mxu0 0
    %756 = vmatprep.subr.bf16.mxu0 0
    %757 = vmatpush1.bf16.msra.mxu0 0
    %758 = vmatprep.subr.bf16.mxu0 0
    %759 = vmatpush1.bf16.msra.mxu0 0
    %760 = vmatprep.subr.bf16.mxu0 0
    %761 = vmatpush1.bf16.msra.mxu0 0
    %762 = vmatprep.mubr.bf16.mxu0 0
    %763 = vmatmul.mubr.bf16.gmra.mrb[0].mxu0 %v725
    %v764 = vpop.f32.mrb[0].mxu0
    %v765 = vadd.f32 0.0, %v764
    %v766 = vpop.f32.mrb[0].mxu0
    %v767 = vpop.f32.mrb[0].mxu0
    %v768 = vpop.f32.mrb[0].mxu0
    %769 = vdwg.mxu0
    %770 = vrot.lane.b32.xlu0 %v108, 104
    %v771 = vpop.permute.xlu0 %770
    %772 = vrot.lane.b32.xlu0 %v108, 72
    %v773 = vpop.permute.xlu0 %772
    %v775 = vsel %vm113, %v771, 0
    %v778 = vsel %vm113, %v773, 0
    %780 = vmatprep.subr.bf16.mxu0 0
    %781 = vmatpush1.bf16.xpose.msra.mxu0 %v778
    %782 = vmatprep.subr.bf16.mxu0 0
    %783 = vmatpush1.bf16.xpose.msra.mxu0 0
    %784 = vmatprep.subr.bf16.mxu0 0
    %785 = vmatpush1.bf16.xpose.msra.mxu0 0
    %786 = vmatprep.subr.bf16.mxu0 0
    %787 = vmatpush1.bf16.xpose.msra.mxu0 0
    %788 = vmatprep.subr.bf16.mxu0 0
    %789 = vmatpush1.bf16.xpose.msra.mxu0 0
    %790 = vmatprep.subr.bf16.mxu0 0
    %791 = vmatpush1.bf16.xpose.msra.mxu0 0
    %792 = vmatprep.subr.bf16.mxu0 0
    %793 = vmatpush1.bf16.xpose.msra.mxu0 0
    %794 = vmatprep.subr.bf16.mxu0 0
    %795 = vmatpush1.bf16.xpose.msra.mxu0 0
    %796 = vmatprep.subr.bf16.mxu0 0
    %797 = vmatpush1.bf16.xpose.msra.mxu0 0
    %798 = vmatprep.subr.bf16.mxu0 0
    %799 = vmatpush1.bf16.xpose.msra.mxu0 0
    %800 = vmatprep.subr.bf16.mxu0 0
    %801 = vmatpush1.bf16.xpose.msra.mxu0 0
    %802 = vmatprep.subr.bf16.mxu0 0
    %803 = vmatpush1.bf16.xpose.msra.mxu0 0
    %804 = vmatprep.subr.bf16.mxu0 0
    %805 = vmatpush1.bf16.xpose.msra.mxu0 0
    %806 = vmatprep.subr.bf16.mxu0 0
    %807 = vmatpush1.bf16.xpose.msra.mxu0 0
    %808 = vmatprep.subr.bf16.mxu0 0
    %809 = vmatpush1.bf16.xpose.msra.mxu0 0
    %810 = vmatprep.subr.bf16.mxu0 0
    %811 = vmatpush1.bf16.xpose.msra.mxu0 0
    %812 = vmatprep.mubr.bf16.mxu0 0
    %813 = vmatmul.mubr.bf16.gmra.mrb[0].mxu0 %v775
    %v814 = vpop.f32.mrb[0].mxu0
    %v815 = vadd.f32 %v32, %v814
    %v816 = vpop.f32.mrb[0].mxu0
    %v817 = vpop.f32.mrb[0].mxu0
    %v818 = vpop.f32.mrb[0].mxu0
    %819 = vdwg.mxu0
    %820 = vrot.lane.b32.xlu0 %v109, 104
    %v821 = vpop.permute.xlu0 %820
    %822 = vrot.lane.b32.xlu0 %v109, 72
    %v823 = vpop.permute.xlu0 %822
    %v825 = vsel %vm113, %v821, 0
    %v828 = vsel %vm113, %v823, 0
    %830 = vmatprep.subr.bf16.mxu0 0
    %831 = vmatpush1.bf16.xpose.msra.mxu0 %v828
    %832 = vmatprep.subr.bf16.mxu0 0
    %833 = vmatpush1.bf16.xpose.msra.mxu0 0
    %834 = vmatprep.subr.bf16.mxu0 0
    %835 = vmatpush1.bf16.xpose.msra.mxu0 0
    %836 = vmatprep.subr.bf16.mxu0 0
    %837 = vmatpush1.bf16.xpose.msra.mxu0 0
    %838 = vmatprep.subr.bf16.mxu0 0
    %839 = vmatpush1.bf16.xpose.msra.mxu0 0
    %840 = vmatprep.subr.bf16.mxu0 0
    %841 = vmatpush1.bf16.xpose.msra.mxu0 0
    %842 = vmatprep.subr.bf16.mxu0 0
    %843 = vmatpush1.bf16.xpose.msra.mxu0 0
    %844 = vmatprep.subr.bf16.mxu0 0
    %845 = vmatpush1.bf16.xpose.msra.mxu0 0
    %846 = vmatprep.subr.bf16.mxu0 0
    %847 = vmatpush1.bf16.xpose.msra.mxu0 0
    %848 = vmatprep.subr.bf16.mxu0 0
    %849 = vmatpush1.bf16.xpose.msra.mxu0 0
    %850 = vmatprep.subr.bf16.mxu0 0
    %851 = vmatpush1.bf16.xpose.msra.mxu0 0
    %852 = vmatprep.subr.bf16.mxu0 0
    %853 = vmatpush1.bf16.xpose.msra.mxu0 0
    %854 = vmatprep.subr.bf16.mxu0 0
    %855 = vmatpush1.bf16.xpose.msra.mxu0 0
    %856 = vmatprep.subr.bf16.mxu0 0
    %857 = vmatpush1.bf16.xpose.msra.mxu0 0
    %858 = vmatprep.subr.bf16.mxu0 0
    %859 = vmatpush1.bf16.xpose.msra.mxu0 0
    %860 = vmatprep.subr.bf16.mxu0 0
    %861 = vmatpush1.bf16.xpose.msra.mxu0 0
    %862 = vmatprep.mubr.bf16.mxu0 0
    %863 = vmatmul.mubr.bf16.gmra.mrb[0].mxu0 %v825
    %v864 = vpop.f32.mrb[0].mxu0
    %v865 = vadd.f32 %v33, %v864
    %v866 = vpop.f32.mrb[0].mxu0
    %v867 = vpop.f32.mrb[0].mxu0
    %v868 = vpop.f32.mrb[0].mxu0
    %869 = vdwg.mxu0
    %v870 = vsel %vm113, %v815, -inf
    %871 = vmax.xlane.f32.xlu0 %v870
    %v872 = vpop.xlane.xlu0 %871
    %v873 = vsel %vm113, %v865, -inf
    %874 = vmax.xlane.f32.xlu0 %v873
    %v875 = vpop.xlane.xlu0 %874
    %v876 = vsub.f32 %v815, %v872
    %v877 = vsub.f32 %v865, %v875
    %v878 = vmul.f32 %v876, 1.442695
    %v879 = vpow.pop %v878
    %v880 = vmul.f32 %v877, 1.442695
    %v881 = vpow.pop %v880
    %v882 = vsel %vm113, %v879, 0.0
    %883 = vadd.xlane.f32.xlu0 %v882
    %v884 = vpop.xlane.xlu0 %883
    %v885 = vsel %vm113, %v881, 0.0
    %886 = vadd.xlane.f32.xlu0 %v885
    %v887 = vpop.xlane.xlu0 %886
    %v888 = vrcp.pop %v884
    %v889 = vmul.f32 %v879, %v888
    %v890 = vrcp.pop %v887
    %v891 = vmul.f32 %v881, %v890
    %v892 = vpack.c.bf16 %v889, %v889
    %v893 = vpack.c.bf16 %v891, %v891
    %894 = vrot.lane.b32.xlu0 %v108, 40
    %v895 = vpop.permute.xlu0 %894
    %v897 = vsel %vm113, %v892, 0
    %v900 = vsel %vm238, %v895, 0
    %902 = vmatprep.subr.bf16.mxu0 0
    %903 = vmatpush1.bf16.msra.mxu0 %v900
    %904 = vmatprep.subr.bf16.mxu0 0
    %905 = vmatpush1.bf16.msra.mxu0 0
    %906 = vmatprep.subr.bf16.mxu0 0
    %907 = vmatpush1.bf16.msra.mxu0 0
    %908 = vmatprep.subr.bf16.mxu0 0
    %909 = vmatpush1.bf16.msra.mxu0 0
    %910 = vmatprep.subr.bf16.mxu0 0
    %911 = vmatpush1.bf16.msra.mxu0 0
    %912 = vmatprep.subr.bf16.mxu0 0
    %913 = vmatpush1.bf16.msra.mxu0 0
    %914 = vmatprep.subr.bf16.mxu0 0
    %915 = vmatpush1.bf16.msra.mxu0 0
    %916 = vmatprep.subr.bf16.mxu0 0
    %917 = vmatpush1.bf16.msra.mxu0 0
    %918 = vmatprep.subr.bf16.mxu0 0
    %919 = vmatpush1.bf16.msra.mxu0 0
    %920 = vmatprep.subr.bf16.mxu0 0
    %921 = vmatpush1.bf16.msra.mxu0 0
    %922 = vmatprep.subr.bf16.mxu0 0
    %923 = vmatpush1.bf16.msra.mxu0 0
    %924 = vmatprep.subr.bf16.mxu0 0
    %925 = vmatpush1.bf16.msra.mxu0 0
    %926 = vmatprep.subr.bf16.mxu0 0
    %927 = vmatpush1.bf16.msra.mxu0 0
    %928 = vmatprep.subr.bf16.mxu0 0
    %929 = vmatpush1.bf16.msra.mxu0 0
    %930 = vmatprep.subr.bf16.mxu0 0
    %931 = vmatpush1.bf16.msra.mxu0 0
    %932 = vmatprep.subr.bf16.mxu0 0
    %933 = vmatpush1.bf16.msra.mxu0 0
    %934 = vmatprep.mubr.bf16.mxu0 0
    %935 = vmatmul.mubr.bf16.gmra.mrb[0].mxu0 %v897
    %v936 = vpop.f32.mrb[0].mxu0
    %v937 = vadd.f32 0.0, %v936
    %v938 = vpop.f32.mrb[0].mxu0
    %v939 = vpop.f32.mrb[0].mxu0
    %v940 = vpop.f32.mrb[0].mxu0
    %941 = vdwg.mxu0
    %942 = vrot.lane.b32.xlu0 %v109, 40
    %v943 = vpop.permute.xlu0 %942
    %v945 = vsel %vm113, %v893, 0
    %v948 = vsel %vm238, %v943, 0
    %950 = vmatprep.subr.bf16.mxu0 0
    %951 = vmatpush1.bf16.msra.mxu0 %v948
    %952 = vmatprep.subr.bf16.mxu0 0
    %953 = vmatpush1.bf16.msra.mxu0 0
    %954 = vmatprep.subr.bf16.mxu0 0
    %955 = vmatpush1.bf16.msra.mxu0 0
    %956 = vmatprep.subr.bf16.mxu0 0
    %957 = vmatpush1.bf16.msra.mxu0 0
    %958 = vmatprep.subr.bf16.mxu0 0
    %959 = vmatpush1.bf16.msra.mxu0 0
    %960 = vmatprep.subr.bf16.mxu0 0
    %961 = vmatpush1.bf16.msra.mxu0 0
    %962 = vmatprep.subr.bf16.mxu0 0
    %963 = vmatpush1.bf16.msra.mxu0 0
    %964 = vmatprep.subr.bf16.mxu0 0
    %965 = vmatpush1.bf16.msra.mxu0 0
    %966 = vmatprep.subr.bf16.mxu0 0
    %967 = vmatpush1.bf16.msra.mxu0 0
    %968 = vmatprep.subr.bf16.mxu0 0
    %969 = vmatpush1.bf16.msra.mxu0 0
    %970 = vmatprep.subr.bf16.mxu0 0
    %971 = vmatpush1.bf16.msra.mxu0 0
    %972 = vmatprep.subr.bf16.mxu0 0
    %973 = vmatpush1.bf16.msra.mxu0 0
    %974 = vmatprep.subr.bf16.mxu0 0
    %975 = vmatpush1.bf16.msra.mxu0 0
    %976 = vmatprep.subr.bf16.mxu0 0
    %977 = vmatpush1.bf16.msra.mxu0 0
    %978 = vmatprep.subr.bf16.mxu0 0
    %979 = vmatpush1.bf16.msra.mxu0 0
    %980 = vmatprep.subr.bf16.mxu0 0
    %981 = vmatpush1.bf16.msra.mxu0 0
    %982 = vmatprep.mubr.bf16.mxu0 0
    %983 = vmatmul.mubr.bf16.gmra.mrb[0].mxu0 %v945
    %v984 = vpop.f32.mrb[0].mxu0
    %v985 = vadd.f32 0.0, %v984
    %v986 = vpop.f32.mrb[0].mxu0
    %v987 = vpop.f32.mrb[0].mxu0
    %v988 = vpop.f32.mrb[0].mxu0
    %989 = vdwg.mxu0
    %992 = vrot.lane.b32.xlu0 %v449, 8
    %v993 = vpop.permute.xlu0 %992
    %994 = vrot.lane.b32.xlu0 %v451, 8
    %v995 = vpop.permute.xlu0 %994
    %1000 = vrot.lane.b32.xlu0 %v669, 16
    %v1001 = vpop.permute.xlu0 %1000
    %1002 = vrot.lane.b32.xlu0 %v671, 16
    %v1003 = vpop.permute.xlu0 %1002
    %1008 = vrot.lane.b32.xlu0 %v889, 24
    %v1009 = vpop.permute.xlu0 %1008
    %1010 = vrot.lane.b32.xlu0 %v891, 24
    %v1011 = vpop.permute.xlu0 %1010
    %v1014 = vsel %vm113, %v228, %v993
    %v1015 = vsel %vm113, %v230, %v995
    %vm1016 = vcmask 130048
    %v1017 = vsel %vm1016, %v1014, %v1001
    %v1018 = vsel %vm1016, %v1015, %v1003
    %vm1019 = vcmask 195584
    %v1020 = vsel %vm1019, %v1017, %v1009
    %v1021 = vsel %vm1019, %v1018, %v1011
    %1022 = vst.msk [vmem:[%s8] sm:$0xff] %vm63, %v1020
    %1023 = vst.msk [vmem:[%s8 + $0x8] sm:$0xff] %vm63, %v1021
    %1026 = vrot.lane.b32.xlu0 %v497, 8
    %v1027 = vpop.permute.xlu0 %1026
    %1028 = vrot.lane.b32.xlu0 %v545, 8
    %v1029 = vpop.permute.xlu0 %1028
    %1034 = vrot.lane.b32.xlu0 %v717, 16
    %v1035 = vpop.permute.xlu0 %1034
    %1036 = vrot.lane.b32.xlu0 %v765, 16
    %v1037 = vpop.permute.xlu0 %1036
    %1042 = vrot.lane.b32.xlu0 %v937, 24
    %v1043 = vpop.permute.xlu0 %1042
    %1044 = vrot.lane.b32.xlu0 %v985, 24
    %v1045 = vpop.permute.xlu0 %1044
    %v1048 = vsel %vm113, %v277, %v1027
    %v1049 = vsel %vm113, %v325, %v1029
    %v1050 = vsel %vm1016, %v1048, %v1035
    %v1051 = vsel %vm1016, %v1049, %v1037
    %v1052 = vsel %vm1019, %v1050, %v1043
    %v1053 = vsel %vm1019, %v1051, %v1045
    %v1054 = vpack.c.bf16 %v1053, %v1052
    %v1055 = vld [vmem:[%s3] sm:$0xf]
    %v1056 = vld [vmem:[%s3 + $0x4] sm:$0xf]
    %v1057 = vld [vmem:[%s3 + $0x8] sm:$0xf]
    %v1058 = vld [vmem:[%s3 + $0xc] sm:$0xf]
    %v1059 = vlaneseq
    %v1060 = vshrl.u32 %v1059, 7
    %v1061 = vsub.s32 0, %v1060
    %v1062 = vrot.slane %v35, %v1061
    %v1067 = vunpack.c.l.b16 %v1055
    %v1068 = vunpack.c.l.b16 %v1056
    %v1069 = vunpack.c.l.b16 %v1057
    %v1070 = vunpack.c.l.b16 %v1058
    %v1071 = vpack.c.b16 %v1068, %v1067
    %v1072 = vpack.c.b16 %v1070, %v1069
    %v1076 = vsel %vm63, %v1054, 0
    %1078 = vmatprep.subr.bf16.mxu0 0
    %1079 = vmatpush1.bf16.msra.mxu0 %v1071
    %1080 = vmatprep.subr.bf16.mxu0 0
    %1081 = vmatpush1.bf16.msra.mxu0 %v1072
    %1082 = vmatprep.subr.bf16.mxu0 0
    %1083 = vmatpush1.bf16.msra.mxu0 0
    %1084 = vmatprep.subr.bf16.mxu0 0
    %1085 = vmatpush1.bf16.msra.mxu0 0
    %1086 = vmatprep.subr.bf16.mxu0 0
    %1087 = vmatpush1.bf16.msra.mxu0 0
    %1088 = vmatprep.subr.bf16.mxu0 0
    %1089 = vmatpush1.bf16.msra.mxu0 0
    %1090 = vmatprep.subr.bf16.mxu0 0
    %1091 = vmatpush1.bf16.msra.mxu0 0
    %1092 = vmatprep.subr.bf16.mxu0 0
    %1093 = vmatpush1.bf16.msra.mxu0 0
    %1094 = vmatprep.subr.bf16.mxu0 0
    %1095 = vmatpush1.bf16.msra.mxu0 0
    %1096 = vmatprep.subr.bf16.mxu0 0
    %1097 = vmatpush1.bf16.msra.mxu0 0
    %1098 = vmatprep.subr.bf16.mxu0 0
    %1099 = vmatpush1.bf16.msra.mxu0 0
    %1100 = vmatprep.subr.bf16.mxu0 0
    %1101 = vmatpush1.bf16.msra.mxu0 0
    %1102 = vmatprep.subr.bf16.mxu0 0
    %1103 = vmatpush1.bf16.msra.mxu0 0
    %1104 = vmatprep.subr.bf16.mxu0 0
    %1105 = vmatpush1.bf16.msra.mxu0 0
    %1106 = vmatprep.subr.bf16.mxu0 0
    %1107 = vmatpush1.bf16.msra.mxu0 0
    %1108 = vmatprep.subr.bf16.mxu0 0
    %1109 = vmatpush1.bf16.msra.mxu0 0
    %1110 = vmatprep.mubr.bf16.mxu0 0
    %1111 = vmatmul.mubr.bf16.gmra.mrb[0].mxu0 %v1076
    %v1112 = vpop.f32.mrb[0].mxu0
    %v1113 = vadd.f32 %v1062, %v1112
    %v1114 = vpop.f32.mrb[0].mxu0
    %v1115 = vpop.f32.mrb[0].mxu0
    %v1116 = vadd.f32 %v1062, %v1115
    %v1117 = vpop.f32.mrb[0].mxu0
    %1118 = vdwg.mxu0
    %v1119 = vadd.f32 %v30, %v1113
    %v1120 = vadd.f32 %v31, %v1116
    %v1121 = vsel %vm63, %v1119, 0.0
    %1122 = vadd.xlane.f32.xlu0 %v1121
    %v1123 = vpop.xlane.xlu0 %1122
    %v1124 = vsel %vm63, %v1120, 0.0
    %1125 = vadd.xlane.f32.xlu0 %v1124
    %v1126 = vpop.xlane.xlu0 %1125
    %v1127 = vrcp.pop 32.0
    %v1128 = vmul.f32 %v1123, %v1127
    %v1129 = vmul.f32 %v1126, %v1127
    %v1130 = vsub.f32 %v1119, %v1128
    %v1131 = vsub.f32 %v1120, %v1129
    %v1132 = vmul.f32 %v1130, %v1130
    %v1133 = vmul.f32 %v1131, %v1131
    %v1134 = vsel %vm63, %v1132, 0.0
    %1135 = vadd.xlane.f32.xlu0 %v1134
    %v1136 = vpop.xlane.xlu0 %1135
    %v1137 = vsel %vm63, %v1133, 0.0
    %1138 = vadd.xlane.f32.xlu0 %v1137
    %v1139 = vpop.xlane.xlu0 %1138
    %v1140 = vmul.f32 %v1136, %v1127
    %v1141 = vmul.f32 %v1139, %v1127
    %v1142 = vadd.f32 %v1140, 1e-12
    %v1143 = vadd.f32 %v1141, 1e-12
    %v1144 = vrsqrt.pop %v1142
    %v1145 = vrsqrt.pop %v1143
    %v1146 = vmul.f32 %v1130, %v1144
    %v1147 = vmul.f32 %v1131, %v1145
    %v1148 = vlaneseq
    %v1149 = vshrl.u32 %v1148, 7
    %v1150 = vsub.s32 0, %v1149
    %v1151 = vrot.slane %v36, %v1150
    %v1152 = vmul.f32 %v1146, %v1151
    %v1153 = vmul.f32 %v1147, %v1151
    %v1154 = vlaneseq
    %v1155 = vshrl.u32 %v1154, 7
    %v1156 = vsub.s32 0, %v1155
    %v1157 = vrot.slane %v37, %v1156
    %v1158 = vadd.f32 %v1152, %v1157
    %v1159 = vadd.f32 %v1153, %v1157
    %v1160 = vpack.c.bf16 %v1159, %v1158
    %v1161 = vld [vmem:[%s4] sm:$0xf]
    %v1162 = vld [vmem:[%s4 + $0x4] sm:$0xf]
    %v1163 = vld [vmem:[%s4 + $0x8] sm:$0xf]
    %v1164 = vld [vmem:[%s4 + $0xc] sm:$0xf]
    %v1165 = vlaneseq
    %v1166 = vshrl.u32 %v1165, 7
    %v1167 = vsub.s32 0, %v1166
    %v1168 = vrot.slane %v38, %v1167
    %v1173 = vunpack.c.l.b16 %v1161
    %v1174 = vunpack.c.l.b16 %v1162
    %v1175 = vunpack.c.l.b16 %v1163
    %v1176 = vunpack.c.l.b16 %v1164
    %v1177 = vpack.c.b16 %v1174, %v1173
    %v1178 = vpack.c.b16 %v1176, %v1175
    %v1182 = vsel %vm63, %v1160, 0
    %1184 = vmatprep.subr.bf16.mxu0 0
    %1185 = vmatpush1.bf16.msra.mxu0 %v1177
    %1186 = vmatprep.subr.bf16.mxu0 0
    %1187 = vmatpush1.bf16.msra.mxu0 %v1178
    %1188 = vmatprep.subr.bf16.mxu0 0
    %1189 = vmatpush1.bf16.msra.mxu0 0
    %1190 = vmatprep.subr.bf16.mxu0 0
    %1191 = vmatpush1.bf16.msra.mxu0 0
    %1192 = vmatprep.subr.bf16.mxu0 0
    %1193 = vmatpush1.bf16.msra.mxu0 0
    %1194 = vmatprep.subr.bf16.mxu0 0
    %1195 = vmatpush1.bf16.msra.mxu0 0
    %1196 = vmatprep.subr.bf16.mxu0 0
    %1197 = vmatpush1.bf16.msra.mxu0 0
    %1198 = vmatprep.subr.bf16.mxu0 0
    %1199 = vmatpush1.bf16.msra.mxu0 0
    %1200 = vmatprep.subr.bf16.mxu0 0
    %1201 = vmatpush1.bf16.msra.mxu0 0
    %1202 = vmatprep.subr.bf16.mxu0 0
    %1203 = vmatpush1.bf16.msra.mxu0 0
    %1204 = vmatprep.subr.bf16.mxu0 0
    %1205 = vmatpush1.bf16.msra.mxu0 0
    %1206 = vmatprep.subr.bf16.mxu0 0
    %1207 = vmatpush1.bf16.msra.mxu0 0
    %1208 = vmatprep.subr.bf16.mxu0 0
    %1209 = vmatpush1.bf16.msra.mxu0 0
    %1210 = vmatprep.subr.bf16.mxu0 0
    %1211 = vmatpush1.bf16.msra.mxu0 0
    %1212 = vmatprep.subr.bf16.mxu0 0
    %1213 = vmatpush1.bf16.msra.mxu0 0
    %1214 = vmatprep.subr.bf16.mxu0 0
    %1215 = vmatpush1.bf16.msra.mxu0 0
    %1216 = vmatprep.mubr.bf16.mxu0 0
    %1217 = vmatmul.mubr.bf16.gmra.mrb[0].mxu0 %v1182
    %v1218 = vpop.f32.mrb[0].mxu0
    %v1219 = vadd.f32 %v1168, %v1218
    %v1220 = vpop.f32.mrb[0].mxu0
    %v1221 = vpop.f32.mrb[0].mxu0
    %v1222 = vadd.f32 %v1168, %v1221
    %v1223 = vpop.f32.mrb[0].mxu0
    %1224 = vdwg.mxu0
    %v1225 = vmul.f32 %v1219, 0.5
    %v1226 = vmul.f32 %v1222, 0.5
    %v1227 = vmul.f32 %v1219, 0.70710677
    %v1228 = vmul.f32 %v1222, 0.70710677
    %v1229 = verf.f32.pop %v1227
    %v1230 = verf.f32.pop %v1228
    %v1231 = vadd.f32 %v1229, 1.0
    %v1232 = vadd.f32 %v1230, 1.0
    %v1233 = vmul.f32 %v1225, %v1231
    %v1234 = vmul.f32 %v1226, %v1232
    %v1235 = vpack.c.bf16 %v1234, %v1233
    %v1236 = vld [vmem:[%s5] sm:$0xf]
    %v1237 = vld [vmem:[%s5 + $0x4] sm:$0xf]
    %v1238 = vld [vmem:[%s5 + $0x8] sm:$0xf]
    %v1239 = vld [vmem:[%s5 + $0xc] sm:$0xf]
    %v1240 = vld [vmem:[%s5 + $0x10] sm:$0xf]
    %v1241 = vld [vmem:[%s5 + $0x14] sm:$0xf]
    %v1242 = vld [vmem:[%s5 + $0x18] sm:$0xf]
    %v1243 = vld [vmem:[%s5 + $0x1c] sm:$0xf]
    %v1244 = vlaneseq
    %v1245 = vshrl.u32 %v1244, 7
    %v1246 = vsub.s32 0, %v1245
    %v1247 = vrot.slane %v39, %v1246
    %v1256 = vunpack.c.l.b16 %v1236
    %v1257 = vunpack.c.l.b16 %v1237
    %v1258 = vunpack.c.l.b16 %v1238
    %v1259 = vunpack.c.l.b16 %v1239
    %v1260 = vunpack.c.l.b16 %v1240
    %v1261 = vunpack.c.l.b16 %v1241
    %v1262 = vunpack.c.l.b16 %v1242
    %v1263 = vunpack.c.l.b16 %v1243
    %v1264 = vpack.c.b16 %v1257, %v1256
    %v1265 = vpack.c.b16 %v1259, %v1258
    %v1266 = vpack.c.b16 %v1261, %v1260
    %v1267 = vpack.c.b16 %v1263, %v1262
    %vm1272 = vcmask 523264
    %v1274 = vsel %vm1272, %v1235, 0
    %1276 = vmatprep.subr.bf16.mxu0 0
    %1277 = vmatpush1.bf16.msra.mxu0 %v1264
    %1278 = vmatprep.subr.bf16.mxu0 0
    %1279 = vmatpush1.bf16.msra.mxu0 %v1265
    %1280 = vmatprep.subr.bf16.mxu0 0
    %1281 = vmatpush1.bf16.msra.mxu0 %v1266
    %1282 = vmatprep.subr.bf16.mxu0 0
    %1283 = vmatpush1.bf16.msra.mxu0 %v1267
    %1284 = vmatprep.subr.bf16.mxu0 0
    %1285 = vmatpush1.bf16.msra.mxu0 0
    %1286 = vmatprep.subr.bf16.mxu0 0
    %1287 = vmatpush1.bf16.msra.mxu0 0
    %1288 = vmatprep.subr.bf16.mxu0 0
    %1289 = vmatpush1.bf16.msra.mxu0 0
    %1290 = vmatprep.subr.bf16.mxu0 0
    %1291 = vmatpush1.bf16.msra.mxu0 0
    %1292 = vmatprep.subr.bf16.mxu0 0
    %1293 = vmatpush1.bf16.msra.mxu0 0
    %1294 = vmatprep.subr.bf16.mxu0 0
    %1295 = vmatpush1.bf16.msra.mxu0 0
    %1296 = vmatprep.subr.bf16.mxu0 0
    %1297 = vmatpush1.bf16.msra.mxu0 0
    %1298 = vmatprep.subr.bf16.mxu0 0
    %1299 = vmatpush1.bf16.msra.mxu0 0
    %1300 = vmatprep.subr.bf16.mxu0 0
    %1301 = vmatpush1.bf16.msra.mxu0 0
    %1302 = vmatprep.subr.bf16.mxu0 0
    %1303 = vmatpush1.bf16.msra.mxu0 0
    %1304 = vmatprep.subr.bf16.mxu0 0
    %1305 = vmatpush1.bf16.msra.mxu0 0
    %1306 = vmatprep.subr.bf16.mxu0 0
    %1307 = vmatpush1.bf16.msra.mxu0 0
    %1308 = vmatprep.mubr.bf16.mxu0 0
    %1309 = vmatmul.mubr.bf16.gmra.mrb[0].mxu0 %v1274
    %v1310 = vpop.f32.mrb[0].mxu0
    %v1311 = vadd.f32 %v1247, %v1310
    %v1312 = vpop.f32.mrb[0].mxu0
    %v1313 = vpop.f32.mrb[0].mxu0
    %v1314 = vadd.f32 %v1247, %v1313
    %v1315 = vpop.f32.mrb[0].mxu0
    %1316 = vdwg.mxu0
    %v1317 = vadd.f32 %v1311, %v1158
    %v1318 = vadd.f32 %v1314, %v1159
    %v1319 = vsel %vm63, %v1317, 0.0
    %1320 = vadd.xlane.f32.xlu0 %v1319
    %v1321 = vpop.xlane.xlu0 %1320
    %v1322 = vsel %vm63, %v1318, 0.0
    %1323 = vadd.xlane.f32.xlu0 %v1322
    %v1324 = vpop.xlane.xlu0 %1323
    %v1325 = vmul.f32 %v1321, %v1127
    %v1326 = vmul.f32 %v1324, %v1127
    %v1327 = vsub.f32 %v1317, %v1325
    %v1328 = vsub.f32 %v1318, %v1326
    %v1329 = vmul.f32 %v1327, %v1327
    %v1330 = vmul.f32 %v1328, %v1328
    %v1331 = vsel %vm63, %v1329, 0.0
    %1332 = vadd.xlane.f32.xlu0 %v1331
    %v1333 = vpop.xlane.xlu0 %1332
    %v1334 = vsel %vm63, %v1330, 0.0
    %1335 = vadd.xlane.f32.xlu0 %v1334
    %v1336 = vpop.xlane.xlu0 %1335
    %v1337 = vmul.f32 %v1333, %v1127
    %v1338 = vmul.f32 %v1336, %v1127
    %v1339 = vadd.f32 %v1337, 1e-12
    %v1340 = vadd.f32 %v1338, 1e-12
    %v1341 = vrsqrt.pop %v1339
    %v1342 = vrsqrt.pop %v1340
    %v1343 = vmul.f32 %v1327, %v1341
    %v1344 = vmul.f32 %v1328, %v1342
    %v1345 = vlaneseq
    %v1346 = vshrl.u32 %v1345, 7
    %v1347 = vsub.s32 0, %v1346
    %v1348 = vrot.slane %v40, %v1347
    %v1349 = vmul.f32 %v1343, %v1348
    %v1350 = vmul.f32 %v1344, %v1348
    %v1351 = vlaneseq
    %v1352 = vshrl.u32 %v1351, 7
    %v1353 = vsub.s32 0, %v1352
    %v1354 = vrot.slane %v41, %v1353
    %v1355 = vadd.f32 %v1349, %v1354
    %v1356 = vadd.f32 %v1350, %v1354
    %1357 = vst.msk [vmem:[#allocation2] sm:$0xff] %vm63, %v1355
    %1358 = vst.msk [vmem:[#allocation2 + $0x8] sm:$0xff] %vm63, %v1356
    // Predicated region
    $region30: #{_lambda_.1} parent=1 // pred_check
      _
    $region31: #{_lambda_.1} parent=1 // pred_check_branch
      %1360 = sbr.rel (0) target = $region33
    $region32: #{_lambda_.1} parent=1 // pred_region
      %s1362 = ssub.s32 256, 256
      %1363 = vsyncadd [#allocation3], %s1362
      %s1364 = sshll.u32 [#allocation2], 4
      %s1365 = int_to_ptr.vmem [resolvable:$true] %s1364
      %1370 = dma.vmem_to_hbm [thread:$0]  %s1365, 256, %s7, [#allocation3], 128, 128, 8
    $region33: #{_lambda_.1} parent=1 // pred_fallthru
      _
    // Predicated region
    $region34: #{_lambda_.1} parent=1 // pred_check
      _
    $region35: #{_lambda_.1} parent=1 // pred_check_branch
      %1372 = sbr.rel (0) target = $region37
    $region36: #{_lambda_.1} parent=1 // pred_region
      _
    $region37: #{_lambda_.1} parent=1 // pred_fallthru
      _
    // Predicated region
    $region38: #{_lambda_.1} parent=1 // pred_check
      _
    $region39: #{_lambda_.1} parent=1 // pred_check_branch
      %1374 = sbr.rel (0) target = $region41
    $region40: #{_lambda_.1} parent=1 // pred_region
      %1375 = dma.done [#allocation3], 256
    $region41: #{_lambda_.1} parent=1 // pred_fallthru
      _
    // Predicated region
    $region42: #{_lambda_.1} parent=1 // pred_check
      _
    $region43: #{_lambda_.1} parent=1 // pred_check_branch
      %1377 = sbr.rel (0) target = $region45
    $region44: #{_lambda_.1} parent=1 // pred_region
      _
    $region45: #{_lambda_.1} parent=1 // pred_fallthru
      _
    %1378 = vsyncpa [#allocation3], 1

</llo_original>
